<compile_context>
chip_gen: v6e
topology: v6e:2x2x1
jax: 0.10.0
libtpu: 0.0.40
codegen_flags: <defaults>
</compile_context>

<pallas_src>
import functools
import math

import jax
import jax.numpy as jnp
from jax import lax
from jax.experimental import pallas as pl
from jax.experimental.pallas import tpu as pltpu


def _gelu(x):
    # BERT-style tanh GELU (matches the reference repo's GELU module).
    return 0.5 * x * (1.0 + jnp.tanh(0.7978845608028654 * (x + 0.044715 * x * x * x)))


def _layer_norm(x, g, b, eps=1e-5):
    mu = jnp.mean(x, axis=-1, keepdims=True)
    var = jnp.mean((x - mu) ** 2, axis=-1, keepdims=True)
    return (x - mu) * lax.rsqrt(var + eps) * g + b


def user_encoder_kernel(x_ref, pos_ref, mask_ref,
                        ln0g_ref, ln0b_ref,
                        ln1g_ref, ln1b_ref,
                        wqkv_ref, bqkv_ref,
                        wo_ref, bo_ref,
                        ln2g_ref, ln2b_ref,
                        w1_ref, b1_ref, w2_ref, b2_ref,
                        out_ref,
                        x_scr,
                        *, n_heads):
    l = pl.program_id(1)
    n_layers = pl.num_programs(1)
    Bt, S, D = x_scr.shape
    H = n_heads
    Dh = D // H
    scale = 1.0 / math.sqrt(Dh)

    # ---- first layer iteration: x0 = LN0(embs + pos_emb) ----
    @pl.when(l == 0)
    def _init():
        x0 = x_ref[...].astype(jnp.float32) + pos_ref[...]             # (Bt,S,D)
        x_scr[...] = _layer_norm(x0, ln0g_ref[0], ln0b_ref[0])

    # Attention bias: causal AND key-valid, recomputed per layer from the
    # VMEM-resident mask block (cheap VPU work, no (Bt,S,S) scratch needed).
    key_valid = mask_ref[...] != 0.0                                    # (Bt,S)
    row = lax.broadcasted_iota(jnp.int32, (S, S), 0)
    col = lax.broadcasted_iota(jnp.int32, (S, S), 1)
    causal = col <= row                                                 # (S,S)
    keep = jnp.logical_and(key_valid[:, None, :], causal[None, :, :])
    bias = jnp.where(keep, 0.0, -1e9).astype(jnp.float32)               # (Bt,S,S)

    x = x_scr[...]                                   # (Bt, S, D) f32 carry
    xf = x.reshape(Bt * S, D)

    def mm(a, w):
        # bf16 MXU matmul with f32 accumulation.
        return jnp.dot(a.astype(jnp.bfloat16), w.astype(jnp.bfloat16),
                       preferred_element_type=jnp.float32)

    # ---- sublayer 1: pre-LN multi-head self-attention + residual ----
    h = _layer_norm(xf, ln1g_ref[0], ln1b_ref[0])                       # (Bt*S, D) f32
    qkv = mm(h, wqkv_ref[0]) + bqkv_ref[0]                              # (Bt*S, 3D)
    q = qkv[:, 0 * D:1 * D] * scale                                     # scale folded into q
    k = qkv[:, 1 * D:2 * D]
    v = qkv[:, 2 * D:3 * D]

    head_outs = []
    for hh in range(H):
        sl = slice(hh * Dh, (hh + 1) * Dh)
        qh = q[:, sl].reshape(Bt, S, Dh)
        kh = k[:, sl].reshape(Bt, S, Dh)
        vh = v[:, sl].reshape(Bt, S, Dh)
        s = jnp.einsum('bqd,bkd->bqk',
                       qh.astype(jnp.bfloat16), kh.astype(jnp.bfloat16),
                       preferred_element_type=jnp.float32) + bias       # f32 scores
        m = jnp.max(s, axis=-1, keepdims=True)
        p = jnp.exp(s - m)
        denom = jnp.sum(p, axis=-1, keepdims=True)
        p = p * pl.reciprocal(denom, approx=True)                       # EUP reciprocal
        o = jnp.einsum('bqk,bkd->bqd',
                       p.astype(jnp.bfloat16), vh.astype(jnp.bfloat16),
                       preferred_element_type=jnp.float32)
        head_outs.append(o)
    attn = jnp.concatenate(head_outs, axis=-1).reshape(Bt * S, D)
    attn = mm(attn, wo_ref[0]) + bo_ref[0]
    x1 = xf + attn

    # ---- sublayer 2: pre-LN position-wise feed-forward (GELU) + residual ----
    h2 = _layer_norm(x1, ln2g_ref[0], ln2b_ref[0])
    f = _gelu(mm(h2, w1_ref[0]) + b1_ref[0])
    f = mm(f, w2_ref[0]) + b2_ref[0]
    x2 = x1 + f

    x_scr[...] = x2.reshape(Bt, S, D)                                   # carry to next layer

    @pl.when(l == n_layers - 1)
    def _write():
        out_ref[...] = x2.reshape(Bt, S, D).astype(out_ref.dtype)


def _pick_batch_tile(B, S):
    # Aim for M = Bt*S around 256 rows so projection/FFN matmuls fill the MXU,
    # while keeping layout-valid tiles (Bt == B, or Bt a multiple of 8 for the
    # (Bt, S) mask block).
    target = max(1, -(-256 // max(S, 1)))
    cands = [bt for bt in range(1, B + 1)
             if B % bt == 0 and (bt == B or bt % 8 == 0)]
    geq = [bt for bt in cands if bt >= target]
    return min(geq) if geq else max(cands)


def user_encoder_forward(input_embs, log_mask, params, *, n_heads, local_rank=None):
    del local_rank  # device-placement only in the torch code
    B, S, D = input_embs.shape
    L = params["w1"].shape[0]
    pos_emb = params["pos_emb"][:S]                  # (S, D)

    Bt = _pick_batch_tile(B, S)
    grid = (B // Bt, L)

    bf16 = jnp.bfloat16
    # Fused QKV projection; large matmul weights pre-cast to bf16 (halves the
    # per-layer streamed weight DMA — matmuls already consumed bf16 operands).
    wqkv = jnp.concatenate([params["wq"], params["wk"], params["wv"]], axis=-1).astype(bf16)
    bqkv = jnp.concatenate([params["bq"], params["bk"], params["bv"]], axis=-1)

    # Per-layer vectors are presented as (L, 1, dim) so the streamed per-layer
    # blocks (1, 1, dim) keep their last two dims equal to the full array dims.
    vec = lambda a: a.reshape(L, 1, a.shape[-1])
    per_layer = [
        vec(params["ln1_g"]), vec(params["ln1_b"]),
        wqkv, vec(bqkv),
        params["wo"].astype(bf16), vec(params["bo"]),
        vec(params["ln2_g"]), vec(params["ln2_b"]),
        params["w1"].astype(bf16), vec(params["b1"]),
        params["w2"].astype(bf16), vec(params["b2"]),
    ]
    ln0g = params["ln0_g"].reshape(1, D)
    ln0b = params["ln0_b"].reshape(1, D)

    def per_layer_spec(arr):
        return pl.BlockSpec((1,) + arr.shape[1:], lambda b, l: (l, 0, 0))

    kernel = functools.partial(user_encoder_kernel, n_heads=n_heads)

    return pl.pallas_call(
        kernel,
        out_shape=jax.ShapeDtypeStruct((B, S, D), input_embs.dtype),
        grid_spec=pltpu.PrefetchScalarGridSpec(
            num_scalar_prefetch=0,
            grid=grid,
            in_specs=[pl.BlockSpec((Bt, S, D), lambda b, l: (b, 0, 0)),   # x tile
                      pl.BlockSpec((S, D), lambda b, l: (0, 0)),          # pos emb
                      pl.BlockSpec((Bt, S), lambda b, l: (b, 0)),         # per-tile mask
                      pl.BlockSpec((1, D), lambda b, l: (0, 0)),          # ln0 gamma
                      pl.BlockSpec((1, D), lambda b, l: (0, 0))]          # ln0 beta
                     + [per_layer_spec(w) for w in per_layer],            # streamed weights
            out_specs=pl.BlockSpec((Bt, S, D), lambda b, l: (b, 0, 0)),   # constant in l
            scratch_shapes=[pltpu.VMEM((Bt, S, D), jnp.float32)],         # x carry
        ),
        compiler_params=pltpu.CompilerParams(
            dimension_semantics=("parallel", "arbitrary")),
    )(input_embs, pos_emb, log_mask, ln0g, ln0b, *per_layer)


def _xavier_normal(key, shape):
    fan_in, fan_out = shape[-2], shape[-1]
    std = math.sqrt(2.0 / (fan_in + fan_out))
    return (std * jax.random.normal(key, shape)).astype(jnp.float32)


def init_params(key, *, item_dim, n_layers, max_seq_len):
    D, FF, L = item_dim, 4 * item_dim, n_layers
    ks = jax.random.split(key, 8)
    zeros = lambda *s: jnp.zeros(s, jnp.float32)
    ones = lambda *s: jnp.ones(s, jnp.float32)
    return {
        "pos_emb": _xavier_normal(ks[0], (max_seq_len, D)),
        "ln0_g": ones(D), "ln0_b": zeros(D),
        "ln1_g": ones(L, D), "ln1_b": zeros(L, D),
        "wq": _xavier_normal(ks[1], (L, D, D)), "bq": zeros(L, D),
        "wk": _xavier_normal(ks[2], (L, D, D)), "bk": zeros(L, D),
        "wv": _xavier_normal(ks[3], (L, D, D)), "bv": zeros(L, D),
        "wo": _xavier_normal(ks[4], (L, D, D)), "bo": zeros(L, D),
        "ln2_g": ones(L, D), "ln2_b": zeros(L, D),
        "w1": _xavier_normal(ks[5], (L, D, FF)), "b1": zeros(L, FF),
        "w2": _xavier_normal(ks[6], (L, FF, D)), "b2": zeros(L, D),
    }


if __name__ == "__main__":
    B, S, D, H, L = 2, 8, 32, 2, 2         # batch, seq, item_dim, heads, layers
    max_seq_len = 8
    key = jax.random.PRNGKey(0)
    k_x, k_p = jax.random.split(key)

    input_embs = jax.random.normal(k_x, (B, S, D), dtype=jnp.float32)
    log_mask = jnp.ones((B, S), dtype=jnp.float32)
    log_mask = log_mask.at[1, 5:].set(0.0)  # second sequence has 3 padded positions

    params = init_params(k_p, item_dim=D, n_layers=L, max_seq_len=max_seq_len)

    out = user_encoder_forward(input_embs, log_mask, params, n_heads=H, local_rank=0)
    jax.block_until_ready(out)
    assert out.shape == (B, S, D) and out.dtype == jnp.float32
    assert bool(jnp.all(jnp.isfinite(out)))
    print("KERNEL_OK")
</pallas_src>

<mosaic_0001>
module attributes {stable_mosaic.version = 11 : i64} {
  func.func @user_encoder_kernel(%arg0: i32, %arg1: i32, %arg2: memref<2x8x32xf32, #tpu.memory_space<vmem>>, %arg3: memref<8x32xf32, #tpu.memory_space<vmem>>, %arg4: memref<2x8xf32, #tpu.memory_space<vmem>>, %arg5: memref<1x32xf32, #tpu.memory_space<vmem>>, %arg6: memref<1x32xf32, #tpu.memory_space<vmem>>, %arg7: memref<1x1x32xf32, #tpu.memory_space<vmem>>, %arg8: memref<1x1x32xf32, #tpu.memory_space<vmem>>, %arg9: memref<1x32x96xbf16, #tpu.memory_space<vmem>>, %arg10: memref<1x1x96xf32, #tpu.memory_space<vmem>>, %arg11: memref<1x32x32xbf16, #tpu.memory_space<vmem>>, %arg12: memref<1x1x32xf32, #tpu.memory_space<vmem>>, %arg13: memref<1x1x32xf32, #tpu.memory_space<vmem>>, %arg14: memref<1x1x32xf32, #tpu.memory_space<vmem>>, %arg15: memref<1x32x128xbf16, #tpu.memory_space<vmem>>, %arg16: memref<1x1x128xf32, #tpu.memory_space<vmem>>, %arg17: memref<1x128x32xbf16, #tpu.memory_space<vmem>>, %arg18: memref<1x1x32xf32, #tpu.memory_space<vmem>>, %arg19: memref<2x8x32xf32, #tpu.memory_space<vmem>>, %arg20: memref<2x8x32xf32, #tpu.memory_space<vmem>>) attributes {dimension_semantics = [#tpu.dimension_semantics<parallel>, #tpu.dimension_semantics<arbitrary>], iteration_bounds = array<i64: 1, 2>, scalar_prefetch = 0 : i64, scratch_operands = 1 : i64, tpu.core_type = #tpu.core_type<tc>, window_params = [{transform_indices = @transform_0, window_bounds = array<i64: 2, 8, 32>}, {pipeline_mode = #tpu.pipeline_mode<synchronous>, transform_indices = @transform_1, window_bounds = array<i64: 8, 32>}, {transform_indices = @transform_2, window_bounds = array<i64: 2, 8>}, {pipeline_mode = #tpu.pipeline_mode<synchronous>, transform_indices = @transform_3, window_bounds = array<i64: 1, 32>}, {pipeline_mode = #tpu.pipeline_mode<synchronous>, transform_indices = @transform_4, window_bounds = array<i64: 1, 32>}, {transform_indices = @transform_5, window_bounds = array<i64: 1, 1, 32>}, {transform_indices = @transform_6, window_bounds = array<i64: 1, 1, 32>}, {transform_indices = @transform_7, window_bounds = array<i64: 1, 32, 96>}, {transform_indices = @transform_8, window_bounds = array<i64: 1, 1, 96>}, {transform_indices = @transform_9, window_bounds = array<i64: 1, 32, 32>}, {transform_indices = @transform_10, window_bounds = array<i64: 1, 1, 32>}, {transform_indices = @transform_11, window_bounds = array<i64: 1, 1, 32>}, {transform_indices = @transform_12, window_bounds = array<i64: 1, 1, 32>}, {transform_indices = @transform_13, window_bounds = array<i64: 1, 32, 128>}, {transform_indices = @transform_14, window_bounds = array<i64: 1, 1, 128>}, {transform_indices = @transform_15, window_bounds = array<i64: 1, 128, 32>}, {transform_indices = @transform_16, window_bounds = array<i64: 1, 1, 32>}, {transform_indices = @transform_17, window_bounds = array<i64: 2, 8, 32>}]} {
    %c0_i32 = arith.constant 0 : i32
    %0 = arith.cmpi eq, %arg1, %c0_i32 : i32
    %1 = arith.extui %0 : i1 to i32
    %c0_i32_0 = arith.constant 0 : i32
    %2 = arith.cmpi ne, %1, %c0_i32_0 : i32
    scf.if %2 {
      %c0_74 = arith.constant 0 : index
      %c0_75 = arith.constant 0 : index
      %c0_76 = arith.constant 0 : index
      %176 = vector.load %arg2[%c0_74, %c0_75, %c0_76] : memref<2x8x32xf32, #tpu.memory_space<vmem>>, vector<2x8x32xf32>
      %c0_77 = arith.constant 0 : index
      %c0_78 = arith.constant 0 : index
      %177 = vector.load %arg3[%c0_77, %c0_78] : memref<8x32xf32, #tpu.memory_space<vmem>>, vector<8x32xf32>
      %178 = vector.shape_cast %177 : vector<8x32xf32> to vector<1x8x32xf32>
      %179 = vector.broadcast %178 : vector<1x8x32xf32> to vector<2x8x32xf32>
      %180 = arith.addf %176, %179 : vector<2x8x32xf32>
      %c0_79 = arith.constant 0 : index
      %c0_80 = arith.constant 0 : index
      %181 = vector.load %arg5[%c0_79, %c0_80] : memref<1x32xf32, #tpu.memory_space<vmem>>, vector<1x32xf32>
      %182 = vector.shape_cast %181 : vector<1x32xf32> to vector<32xf32>
      %c0_81 = arith.constant 0 : index
      %c0_82 = arith.constant 0 : index
      %183 = vector.load %arg6[%c0_81, %c0_82] : memref<1x32xf32, #tpu.memory_space<vmem>>, vector<1x32xf32>
      %184 = vector.shape_cast %183 : vector<1x32xf32> to vector<32xf32>
      %cst_83 = arith.constant dense<0.000000e+00> : vector<2x8xf32>
      %185 = vector.multi_reduction <add>, %180, %cst_83 [2] : vector<2x8x32xf32> to vector<2x8xf32>
      %186 = vector.shape_cast %185 : vector<2x8xf32> to vector<2x8x1xf32>
      %cst_84 = arith.constant 3.200000e+01 : f32
      %187 = vector.broadcast %cst_84 : f32 to vector<2x8x1xf32>
      %188 = arith.divf %186, %187 : vector<2x8x1xf32>
      %189 = vector.broadcast %188 : vector<2x8x1xf32> to vector<2x8x32xf32>
      %190 = arith.subf %180, %189 : vector<2x8x32xf32>
      %191 = arith.mulf %190, %190 : vector<2x8x32xf32>
      %cst_85 = arith.constant dense<0.000000e+00> : vector<2x8xf32>
      %192 = vector.multi_reduction <add>, %191, %cst_85 [2] : vector<2x8x32xf32> to vector<2x8xf32>
      %193 = vector.shape_cast %192 : vector<2x8xf32> to vector<2x8x1xf32>
      %cst_86 = arith.constant 3.200000e+01 : f32
      %194 = vector.broadcast %cst_86 : f32 to vector<2x8x1xf32>
      %195 = arith.divf %193, %194 : vector<2x8x1xf32>
      %196 = vector.broadcast %188 : vector<2x8x1xf32> to vector<2x8x32xf32>
      %197 = arith.subf %180, %196 : vector<2x8x32xf32>
      %cst_87 = arith.constant 9.99999974E-6 : f32
      %198 = vector.broadcast %cst_87 : f32 to vector<2x8x1xf32>
      %199 = arith.addf %195, %198 : vector<2x8x1xf32>
      %200 = math.rsqrt %199 : vector<2x8x1xf32>
      %201 = vector.broadcast %200 : vector<2x8x1xf32> to vector<2x8x32xf32>
      %202 = arith.mulf %197, %201 : vector<2x8x32xf32>
      %203 = vector.shape_cast %182 : vector<32xf32> to vector<1x1x32xf32>
      %204 = vector.broadcast %203 : vector<1x1x32xf32> to vector<2x8x32xf32>
      %205 = arith.mulf %202, %204 : vector<2x8x32xf32>
      %206 = vector.shape_cast %184 : vector<32xf32> to vector<1x1x32xf32>
      %207 = vector.broadcast %206 : vector<1x1x32xf32> to vector<2x8x32xf32>
      %208 = arith.addf %205, %207 : vector<2x8x32xf32>
      %c0_88 = arith.constant 0 : index
      %c0_89 = arith.constant 0 : index
      %c0_90 = arith.constant 0 : index
      %209 = vector.load %arg20[%c0_88, %c0_89, %c0_90] : memref<2x8x32xf32, #tpu.memory_space<vmem>>, vector<2x8x32xf32>
      tpu.vector_store %arg20[%c0_88, %c0_89, %c0_90], %208 {strides = array<i32>} : memref<2x8x32xf32, #tpu.memory_space<vmem>>, vector<2x8x32xf32>,
    } else {
    }
    %c0 = arith.constant 0 : index
    %c0_1 = arith.constant 0 : index
    %3 = vector.load %arg4[%c0, %c0_1] : memref<2x8xf32, #tpu.memory_space<vmem>>, vector<2x8xf32>
    %cst = arith.constant 0.000000e+00 : f32
    %4 = vector.broadcast %cst : f32 to vector<2x8xf32>
    %5 = arith.cmpf one, %3, %4 : vector<2x8xf32>
    %6 = tpu.iota {dimensions = array<i32: 0>} : vector<8x8xi32>
    %7 = tpu.iota {dimensions = array<i32: 1>} : vector<8x8xi32>
    %8 = arith.cmpi sle, %7, %6 : vector<8x8xi32>
    %9 = vector.shape_cast %5 : vector<2x8xi1> to vector<2x1x8xi1>
    %10 = vector.shape_cast %8 : vector<8x8xi1> to vector<1x8x8xi1>
    %11 = vector.broadcast %9 : vector<2x1x8xi1> to vector<2x8x8xi1>
    %12 = vector.broadcast %10 : vector<1x8x8xi1> to vector<2x8x8xi1>
    %13 = arith.andi %11, %12 : vector<2x8x8xi1>
    %cst_2 = arith.constant 0.000000e+00 : f32
    %cst_3 = arith.constant -1.000000e+09 : f32
    %14 = vector.broadcast %cst_2 : f32 to vector<2x8x8xf32>
    %15 = vector.broadcast %cst_3 : f32 to vector<2x8x8xf32>
    %16 = arith.select %13, %14, %15 : vector<2x8x8xi1>, vector<2x8x8xf32>
    %c0_4 = arith.constant 0 : index
    %c0_5 = arith.constant 0 : index
    %c0_6 = arith.constant 0 : index
    %17 = vector.load %arg20[%c0_4, %c0_5, %c0_6] : memref<2x8x32xf32, #tpu.memory_space<vmem>>, vector<2x8x32xf32>
    %18 = vector.shape_cast %17 : vector<2x8x32xf32> to vector<16x32xf32>
    %c0_7 = arith.constant 0 : index
    %c0_8 = arith.constant 0 : index
    %c0_9 = arith.constant 0 : index
    %19 = vector.load %arg7[%c0_7, %c0_8, %c0_9] : memref<1x1x32xf32, #tpu.memory_space<vmem>>, vector<1x1x32xf32>
    %20 = vector.shape_cast %19 : vector<1x1x32xf32> to vector<1x32xf32>
    %c0_10 = arith.constant 0 : index
    %c0_11 = arith.constant 0 : index
    %c0_12 = arith.constant 0 : index
    %21 = vector.load %arg8[%c0_10, %c0_11, %c0_12] : memref<1x1x32xf32, #tpu.memory_space<vmem>>, vector<1x1x32xf32>
    %22 = vector.shape_cast %21 : vector<1x1x32xf32> to vector<1x32xf32>
    %cst_13 = arith.constant dense<0.000000e+00> : vector<16xf32>
    %23 = vector.multi_reduction <add>, %18, %cst_13 [1] : vector<16x32xf32> to vector<16xf32>
    %24 = vector.shape_cast %23 : vector<16xf32> to vector<16x1xf32>
    %cst_14 = arith.constant 3.200000e+01 : f32
    %25 = vector.broadcast %cst_14 : f32 to vector<16x1xf32>
    %26 = arith.divf %24, %25 : vector<16x1xf32>
    %27 = vector.broadcast %26 : vector<16x1xf32> to vector<16x32xf32>
    %28 = arith.subf %18, %27 : vector<16x32xf32>
    %29 = arith.mulf %28, %28 : vector<16x32xf32>
    %cst_15 = arith.constant dense<0.000000e+00> : vector<16xf32>
    %30 = vector.multi_reduction <add>, %29, %cst_15 [1] : vector<16x32xf32> to vector<16xf32>
    %31 = vector.shape_cast %30 : vector<16xf32> to vector<16x1xf32>
    %cst_16 = arith.constant 3.200000e+01 : f32
    %32 = vector.broadcast %cst_16 : f32 to vector<16x1xf32>
    %33 = arith.divf %31, %32 : vector<16x1xf32>
    %34 = vector.broadcast %26 : vector<16x1xf32> to vector<16x32xf32>
    %35 = arith.subf %18, %34 : vector<16x32xf32>
    %cst_17 = arith.constant 9.99999974E-6 : f32
    %36 = vector.broadcast %cst_17 : f32 to vector<16x1xf32>
    %37 = arith.addf %33, %36 : vector<16x1xf32>
    %38 = math.rsqrt %37 : vector<16x1xf32>
    %39 = vector.broadcast %38 : vector<16x1xf32> to vector<16x32xf32>
    %40 = arith.mulf %35, %39 : vector<16x32xf32>
    %41 = vector.broadcast %20 : vector<1x32xf32> to vector<16x32xf32>
    %42 = arith.mulf %40, %41 : vector<16x32xf32>
    %43 = vector.broadcast %22 : vector<1x32xf32> to vector<16x32xf32>
    %44 = arith.addf %42, %43 : vector<16x32xf32>
    %c0_18 = arith.constant 0 : index
    %c0_19 = arith.constant 0 : index
    %c0_20 = arith.constant 0 : index
    %45 = vector.load %arg9[%c0_18, %c0_19, %c0_20] : memref<1x32x96xbf16, #tpu.memory_space<vmem>>, vector<1x32x96xbf16>
    %46 = vector.shape_cast %45 : vector<1x32x96xbf16> to vector<32x96xbf16>
    %47 = arith.truncf %44 : vector<16x32xf32> to vector<16x32xbf16>
    %cst_21 = arith.constant dense<0.000000e+00> : vector<16x96xf32>
    %48 = tpu.matmul %47, %46, %cst_21 {dimension_numbers = #tpu.dot_dimension_numbers<[1], [0], [0], [1], [0, 0, 1, 1], [], []>} : vector<16x32xbf16>, vector<32x96xbf16>, vector<16x96xf32> -> vector<16x96xf32>
    %c0_22 = arith.constant 0 : index
    %c0_23 = arith.constant 0 : index
    %c0_24 = arith.constant 0 : index
    %49 = vector.load %arg10[%c0_22, %c0_23, %c0_24] : memref<1x1x96xf32, #tpu.memory_space<vmem>>, vector<1x1x96xf32>
    %50 = vector.shape_cast %49 : vector<1x1x96xf32> to vector<1x96xf32>
    %51 = vector.broadcast %50 : vector<1x96xf32> to vector<16x96xf32>
    %52 = arith.addf %48, %51 : vector<16x96xf32>
    %53 = vector.extract_strided_slice %52 {offsets = [0, 0], sizes = [16, 32], strides = [1, 1]} : vector<16x96xf32> to vector<16x32xf32>
    %cst_25 = arith.constant 2.500000e-01 : f32
    %54 = vector.broadcast %cst_25 : f32 to vector<16x32xf32>
    %55 = arith.mulf %53, %54 : vector<16x32xf32>
    %56 = vector.extract_strided_slice %52 {offsets = [0, 32], sizes = [16, 32], strides = [1, 1]} : vector<16x96xf32> to vector<16x32xf32>
    %57 = vector.extract_strided_slice %52 {offsets = [0, 64], sizes = [16, 32], strides = [1, 1]} : vector<16x96xf32> to vector<16x32xf32>
    %58 = vector.extract_strided_slice %55 {offsets = [0, 0], sizes = [16, 16], strides = [1, 1]} : vector<16x32xf32> to vector<16x16xf32>
    %59 = vector.shape_cast %58 : vector<16x16xf32> to vector<2x8x16xf32>
    %60 = vector.extract_strided_slice %56 {offsets = [0, 0], sizes = [16, 16], strides = [1, 1]} : vector<16x32xf32> to vector<16x16xf32>
    %61 = vector.shape_cast %60 : vector<16x16xf32> to vector<2x8x16xf32>
    %62 = vector.extract_strided_slice %57 {offsets = [0, 0], sizes = [16, 16], strides = [1, 1]} : vector<16x32xf32> to vector<16x16xf32>
    %63 = vector.shape_cast %62 : vector<16x16xf32> to vector<2x8x16xf32>
    %64 = arith.truncf %59 : vector<2x8x16xf32> to vector<2x8x16xbf16>
    %65 = arith.truncf %61 : vector<2x8x16xf32> to vector<2x8x16xbf16>
    "tpu.trace_start"() <{level = 10 : i32, message = "bqd,bkd->bqk"}> : () -> ()
    %cst_26 = arith.constant dense<0.000000e+00> : vector<2x8x8xf32>
    %66 = tpu.matmul %64, %65, %cst_26 {dimension_numbers = #tpu.dot_dimension_numbers<[2], [2], [1], [1], [0, 0, 0, 1, 1, 1], [0], [0]>} : vector<2x8x16xbf16>, vector<2x8x16xbf16>, vector<2x8x8xf32> -> vector<2x8x8xf32>
    "tpu.trace_stop"() : () -> ()
    %67 = arith.addf %66, %16 : vector<2x8x8xf32>
    %cst_27 = arith.constant dense<0xFF800000> : vector<2x8xf32>
    %68 = vector.multi_reduction <maximumf>, %67, %cst_27 [2] : vector<2x8x8xf32> to vector<2x8xf32>
    %69 = vector.shape_cast %68 : vector<2x8xf32> to vector<2x8x1xf32>
    %70 = vector.broadcast %69 : vector<2x8x1xf32> to vector<2x8x8xf32>
    %71 = arith.subf %67, %70 : vector<2x8x8xf32>
    %72 = math.exp %71 : vector<2x8x8xf32>
    %cst_28 = arith.constant dense<0.000000e+00> : vector<2x8xf32>
    %73 = vector.multi_reduction <add>, %72, %cst_28 [2] : vector<2x8x8xf32> to vector<2x8xf32>
    %74 = vector.shape_cast %73 : vector<2x8xf32> to vector<2x8x1xf32>
    %75 = tpu.reciprocal %74 {approx = true} : vector<2x8x1xf32> -> vector<2x8x1xf32>
    %76 = vector.broadcast %75 : vector<2x8x1xf32> to vector<2x8x8xf32>
    %77 = arith.mulf %72, %76 : vector<2x8x8xf32>
    %78 = arith.truncf %77 : vector<2x8x8xf32> to vector<2x8x8xbf16>
    %79 = arith.truncf %63 : vector<2x8x16xf32> to vector<2x8x16xbf16>
    "tpu.trace_start"() <{level = 10 : i32, message = "bqk,bkd->bqd"}> : () -> ()
    %cst_29 = arith.constant dense<0.000000e+00> : vector<2x8x16xf32>
    %80 = tpu.matmul %78, %79, %cst_29 {dimension_numbers = #tpu.dot_dimension_numbers<[2], [1], [1], [2], [0, 0, 0, 1, 1, 2], [0], [0]>} : vector<2x8x8xbf16>, vector<2x8x16xbf16>, vector<2x8x16xf32> -> vector<2x8x16xf32>
    "tpu.trace_stop"() : () -> ()
    %81 = vector.extract_strided_slice %55 {offsets = [0, 16], sizes = [16, 16], strides = [1, 1]} : vector<16x32xf32> to vector<16x16xf32>
    %82 = vector.shape_cast %81 : vector<16x16xf32> to vector<2x8x16xf32>
    %83 = vector.extract_strided_slice %56 {offsets = [0, 16], sizes = [16, 16], strides = [1, 1]} : vector<16x32xf32> to vector<16x16xf32>
    %84 = vector.shape_cast %83 : vector<16x16xf32> to vector<2x8x16xf32>
    %85 = vector.extract_strided_slice %57 {offsets = [0, 16], sizes = [16, 16], strides = [1, 1]} : vector<16x32xf32> to vector<16x16xf32>
    %86 = vector.shape_cast %85 : vector<16x16xf32> to vector<2x8x16xf32>
    %87 = arith.truncf %82 : vector<2x8x16xf32> to vector<2x8x16xbf16>
    %88 = arith.truncf %84 : vector<2x8x16xf32> to vector<2x8x16xbf16>
    "tpu.trace_start"() <{level = 10 : i32, message = "bqd,bkd->bqk"}> : () -> ()
    %cst_30 = arith.constant dense<0.000000e+00> : vector<2x8x8xf32>
    %89 = tpu.matmul %87, %88, %cst_30 {dimension_numbers = #tpu.dot_dimension_numbers<[2], [2], [1], [1], [0, 0, 0, 1, 1, 1], [0], [0]>} : vector<2x8x16xbf16>, vector<2x8x16xbf16>, vector<2x8x8xf32> -> vector<2x8x8xf32>
    "tpu.trace_stop"() : () -> ()
    %90 = arith.addf %89, %16 : vector<2x8x8xf32>
    %cst_31 = arith.constant dense<0xFF800000> : vector<2x8xf32>
    %91 = vector.multi_reduction <maximumf>, %90, %cst_31 [2] : vector<2x8x8xf32> to vector<2x8xf32>
    %92 = vector.shape_cast %91 : vector<2x8xf32> to vector<2x8x1xf32>
    %93 = vector.broadcast %92 : vector<2x8x1xf32> to vector<2x8x8xf32>
    %94 = arith.subf %90, %93 : vector<2x8x8xf32>
    %95 = math.exp %94 : vector<2x8x8xf32>
    %cst_32 = arith.constant dense<0.000000e+00> : vector<2x8xf32>
    %96 = vector.multi_reduction <add>, %95, %cst_32 [2] : vector<2x8x8xf32> to vector<2x8xf32>
    %97 = vector.shape_cast %96 : vector<2x8xf32> to vector<2x8x1xf32>
    %98 = tpu.reciprocal %97 {approx = true} : vector<2x8x1xf32> -> vector<2x8x1xf32>
    %99 = vector.broadcast %98 : vector<2x8x1xf32> to vector<2x8x8xf32>
    %100 = arith.mulf %95, %99 : vector<2x8x8xf32>
    %101 = arith.truncf %100 : vector<2x8x8xf32> to vector<2x8x8xbf16>
    %102 = arith.truncf %86 : vector<2x8x16xf32> to vector<2x8x16xbf16>
    "tpu.trace_start"() <{level = 10 : i32, message = "bqk,bkd->bqd"}> : () -> ()
    %cst_33 = arith.constant dense<0.000000e+00> : vector<2x8x16xf32>
    %103 = tpu.matmul %101, %102, %cst_33 {dimension_numbers = #tpu.dot_dimension_numbers<[2], [1], [1], [2], [0, 0, 0, 1, 1, 2], [0], [0]>} : vector<2x8x8xbf16>, vector<2x8x16xbf16>, vector<2x8x16xf32> -> vector<2x8x16xf32>
    "tpu.trace_stop"() : () -> ()
    %104 = tpu.concatenate %80, %103 in 2 : vector<2x8x16xf32>, vector<2x8x16xf32> -> vector<2x8x32xf32>
    %105 = vector.shape_cast %104 : vector<2x8x32xf32> to vector<16x32xf32>
    %c0_34 = arith.constant 0 : index
    %c0_35 = arith.constant 0 : index
    %c0_36 = arith.constant 0 : index
    %106 = vector.load %arg11[%c0_34, %c0_35, %c0_36] : memref<1x32x32xbf16, #tpu.memory_space<vmem>>, vector<1x32x32xbf16>
    %107 = vector.shape_cast %106 : vector<1x32x32xbf16> to vector<32x32xbf16>
    %108 = arith.truncf %105 : vector<16x32xf32> to vector<16x32xbf16>
    %cst_37 = arith.constant dense<0.000000e+00> : vector<16x32xf32>
    %109 = tpu.matmul %108, %107, %cst_37 {dimension_numbers = #tpu.dot_dimension_numbers<[1], [0], [0], [1], [0, 0, 1, 1], [], []>} : vector<16x32xbf16>, vector<32x32xbf16>, vector<16x32xf32> -> vector<16x32xf32>
    %c0_38 = arith.constant 0 : index
    %c0_39 = arith.constant 0 : index
    %c0_40 = arith.constant 0 : index
    %110 = vector.load %arg12[%c0_38, %c0_39, %c0_40] : memref<1x1x32xf32, #tpu.memory_space<vmem>>, vector<1x1x32xf32>
    %111 = vector.shape_cast %110 : vector<1x1x32xf32> to vector<1x32xf32>
    %112 = vector.broadcast %111 : vector<1x32xf32> to vector<16x32xf32>
    %113 = arith.addf %109, %112 : vector<16x32xf32>
    %114 = arith.addf %18, %113 : vector<16x32xf32>
    %c0_41 = arith.constant 0 : index
    %c0_42 = arith.constant 0 : index
    %c0_43 = arith.constant 0 : index
    %115 = vector.load %arg13[%c0_41, %c0_42, %c0_43] : memref<1x1x32xf32, #tpu.memory_space<vmem>>, vector<1x1x32xf32>
    %116 = vector.shape_cast %115 : vector<1x1x32xf32> to vector<1x32xf32>
    %c0_44 = arith.constant 0 : index
    %c0_45 = arith.constant 0 : index
    %c0_46 = arith.constant 0 : index
    %117 = vector.load %arg14[%c0_44, %c0_45, %c0_46] : memref<1x1x32xf32, #tpu.memory_space<vmem>>, vector<1x1x32xf32>
    %118 = vector.shape_cast %117 : vector<1x1x32xf32> to vector<1x32xf32>
    %cst_47 = arith.constant dense<0.000000e+00> : vector<16xf32>
    %119 = vector.multi_reduction <add>, %114, %cst_47 [1] : vector<16x32xf32> to vector<16xf32>
    %120 = vector.shape_cast %119 : vector<16xf32> to vector<16x1xf32>
    %cst_48 = arith.constant 3.200000e+01 : f32
    %121 = vector.broadcast %cst_48 : f32 to vector<16x1xf32>
    %122 = arith.divf %120, %121 : vector<16x1xf32>
    %123 = vector.broadcast %122 : vector<16x1xf32> to vector<16x32xf32>
    %124 = arith.subf %114, %123 : vector<16x32xf32>
    %125 = arith.mulf %124, %124 : vector<16x32xf32>
    %cst_49 = arith.constant dense<0.000000e+00> : vector<16xf32>
    %126 = vector.multi_reduction <add>, %125, %cst_49 [1] : vector<16x32xf32> to vector<16xf32>
    %127 = vector.shape_cast %126 : vector<16xf32> to vector<16x1xf32>
    %cst_50 = arith.constant 3.200000e+01 : f32
    %128 = vector.broadcast %cst_50 : f32 to vector<16x1xf32>
    %129 = arith.divf %127, %128 : vector<16x1xf32>
    %130 = vector.broadcast %122 : vector<16x1xf32> to vector<16x32xf32>
    %131 = arith.subf %114, %130 : vector<16x32xf32>
    %cst_51 = arith.constant 9.99999974E-6 : f32
    %132 = vector.broadcast %cst_51 : f32 to vector<16x1xf32>
    %133 = arith.addf %129, %132 : vector<16x1xf32>
    %134 = math.rsqrt %133 : vector<16x1xf32>
    %135 = vector.broadcast %134 : vector<16x1xf32> to vector<16x32xf32>
    %136 = arith.mulf %131, %135 : vector<16x32xf32>
    %137 = vector.broadcast %116 : vector<1x32xf32> to vector<16x32xf32>
    %138 = arith.mulf %136, %137 : vector<16x32xf32>
    %139 = vector.broadcast %118 : vector<1x32xf32> to vector<16x32xf32>
    %140 = arith.addf %138, %139 : vector<16x32xf32>
    %c0_52 = arith.constant 0 : index
    %c0_53 = arith.constant 0 : index
    %c0_54 = arith.constant 0 : index
    %141 = vector.load %arg15[%c0_52, %c0_53, %c0_54] : memref<1x32x128xbf16, #tpu.memory_space<vmem>>, vector<1x32x128xbf16>
    %142 = vector.shape_cast %141 : vector<1x32x128xbf16> to vector<32x128xbf16>
    %143 = arith.truncf %140 : vector<16x32xf32> to vector<16x32xbf16>
    %cst_55 = arith.constant dense<0.000000e+00> : vector<16x128xf32>
    %144 = tpu.matmul %143, %142, %cst_55 {dimension_numbers = #tpu.dot_dimension_numbers<[1], [0], [0], [1], [0, 0, 1, 1], [], []>} : vector<16x32xbf16>, vector<32x128xbf16>, vector<16x128xf32> -> vector<16x128xf32>
    %c0_56 = arith.constant 0 : index
    %c0_57 = arith.constant 0 : index
    %c0_58 = arith.constant 0 : index
    %145 = vector.load %arg16[%c0_56, %c0_57, %c0_58] : memref<1x1x128xf32, #tpu.memory_space<vmem>>, vector<1x1x128xf32>
    %146 = vector.shape_cast %145 : vector<1x1x128xf32> to vector<1x128xf32>
    %147 = vector.broadcast %146 : vector<1x128xf32> to vector<16x128xf32>
    %148 = arith.addf %144, %147 : vector<16x128xf32>
    %cst_59 = arith.constant 5.000000e-01 : f32
    %149 = vector.broadcast %cst_59 : f32 to vector<16x128xf32>
    %150 = arith.mulf %149, %148 : vector<16x128xf32>
    %cst_60 = arith.constant 4.471500e-02 : f32
    %151 = vector.broadcast %cst_60 : f32 to vector<16x128xf32>
    %152 = arith.mulf %151, %148 : vector<16x128xf32>
    %153 = arith.mulf %152, %148 : vector<16x128xf32>
    %154 = arith.mulf %153, %148 : vector<16x128xf32>
    %155 = arith.addf %148, %154 : vector<16x128xf32>
    %cst_61 = arith.constant 0.797884583 : f32
    %156 = vector.broadcast %cst_61 : f32 to vector<16x128xf32>
    %157 = arith.mulf %156, %155 : vector<16x128xf32>
    %158 = math.tanh %157 : vector<16x128xf32>
    %cst_62 = arith.constant 1.000000e+00 : f32
    %159 = vector.broadcast %cst_62 : f32 to vector<16x128xf32>
    %160 = arith.addf %159, %158 : vector<16x128xf32>
    %161 = arith.mulf %150, %160 : vector<16x128xf32>
    %c0_63 = arith.constant 0 : index
    %c0_64 = arith.constant 0 : index
    %c0_65 = arith.constant 0 : index
    %162 = vector.load %arg17[%c0_63, %c0_64, %c0_65] : memref<1x128x32xbf16, #tpu.memory_space<vmem>>, vector<1x128x32xbf16>
    %163 = vector.shape_cast %162 : vector<1x128x32xbf16> to vector<128x32xbf16>
    %164 = arith.truncf %161 : vector<16x128xf32> to vector<16x128xbf16>
    %cst_66 = arith.constant dense<0.000000e+00> : vector<16x32xf32>
    %165 = tpu.matmul %164, %163, %cst_66 {dimension_numbers = #tpu.dot_dimension_numbers<[1], [0], [0], [1], [0, 0, 1, 1], [], []>} : vector<16x128xbf16>, vector<128x32xbf16>, vector<16x32xf32> -> vector<16x32xf32>
    %c0_67 = arith.constant 0 : index
    %c0_68 = arith.constant 0 : index
    %c0_69 = arith.constant 0 : index
    %166 = vector.load %arg18[%c0_67, %c0_68, %c0_69] : memref<1x1x32xf32, #tpu.memory_space<vmem>>, vector<1x1x32xf32>
    %167 = vector.shape_cast %166 : vector<1x1x32xf32> to vector<1x32xf32>
    %168 = vector.broadcast %167 : vector<1x32xf32> to vector<16x32xf32>
    %169 = arith.addf %165, %168 : vector<16x32xf32>
    %170 = arith.addf %114, %169 : vector<16x32xf32>
    %171 = vector.shape_cast %170 : vector<16x32xf32> to vector<2x8x32xf32>
    %c0_70 = arith.constant 0 : index
    %c0_71 = arith.constant 0 : index
    %c0_72 = arith.constant 0 : index
    %172 = vector.load %arg20[%c0_70, %c0_71, %c0_72] : memref<2x8x32xf32, #tpu.memory_space<vmem>>, vector<2x8x32xf32>
    tpu.vector_store %arg20[%c0_70, %c0_71, %c0_72], %171 {strides = array<i32>} : memref<2x8x32xf32, #tpu.memory_space<vmem>>, vector<2x8x32xf32>,
    %c1_i32 = arith.constant 1 : i32
    %173 = arith.cmpi eq, %arg1, %c1_i32 : i32
    %174 = arith.extui %173 : i1 to i32
    %c0_i32_73 = arith.constant 0 : i32
    %175 = arith.cmpi ne, %174, %c0_i32_73 : i32
    scf.if %175 {
      %176 = vector.shape_cast %170 : vector<16x32xf32> to vector<2x8x32xf32>
      %c0_74 = arith.constant 0 : index
      %c0_75 = arith.constant 0 : index
      %c0_76 = arith.constant 0 : index
      %177 = vector.load %arg19[%c0_74, %c0_75, %c0_76] : memref<2x8x32xf32, #tpu.memory_space<vmem>>, vector<2x8x32xf32>
      tpu.vector_store %arg19[%c0_74, %c0_75, %c0_76], %176 {strides = array<i32>} : memref<2x8x32xf32, #tpu.memory_space<vmem>>, vector<2x8x32xf32>,
    } else {
    }
    return
  }
  func.func @transform_0(%arg0: i32, %arg1: i32) -> (i32, i32, i32) {
    %c0_i32 = arith.constant 0 : i32
    %c0_i32_0 = arith.constant 0 : i32
    %c0_i32_1 = arith.constant 0 : i32
    return %arg0, %c0_i32, %c0_i32_0 : i32, i32, i32
  }
  func.func @transform_1(%arg0: i32, %arg1: i32) -> (i32, i32) {
    %c0_i32 = arith.constant 0 : i32
    %c0_i32_0 = arith.constant 0 : i32
    %c0_i32_1 = arith.constant 0 : i32
    return %c0_i32, %c0_i32_0 : i32, i32
  }
  func.func @transform_2(%arg0: i32, %arg1: i32) -> (i32, i32) {
    %c0_i32 = arith.constant 0 : i32
    %c0_i32_0 = arith.constant 0 : i32
    return %arg0, %c0_i32 : i32, i32
  }
  func.func @transform_3(%arg0: i32, %arg1: i32) -> (i32, i32) {
    %c0_i32 = arith.constant 0 : i32
    %c0_i32_0 = arith.constant 0 : i32
    %c0_i32_1 = arith.constant 0 : i32
    return %c0_i32, %c0_i32_0 : i32, i32
  }
  func.func @transform_4(%arg0: i32, %arg1: i32) -> (i32, i32) {
    %c0_i32 = arith.constant 0 : i32
    %c0_i32_0 = arith.constant 0 : i32
    %c0_i32_1 = arith.constant 0 : i32
    return %c0_i32, %c0_i32_0 : i32, i32
  }
  func.func @transform_5(%arg0: i32, %arg1: i32) -> (i32, i32, i32) {
    %c0_i32 = arith.constant 0 : i32
    %c0_i32_0 = arith.constant 0 : i32
    %c0_i32_1 = arith.constant 0 : i32
    return %arg1, %c0_i32, %c0_i32_0 : i32, i32, i32
  }
  func.func @transform_6(%arg0: i32, %arg1: i32) -> (i32, i32, i32) {
    %c0_i32 = arith.constant 0 : i32
    %c0_i32_0 = arith.constant 0 : i32
    %c0_i32_1 = arith.constant 0 : i32
    return %arg1, %c0_i32, %c0_i32_0 : i32, i32, i32
  }
  func.func @transform_7(%arg0: i32, %arg1: i32) -> (i32, i32, i32) {
    %c0_i32 = arith.constant 0 : i32
    %c0_i32_0 = arith.constant 0 : i32
    %c0_i32_1 = arith.constant 0 : i32
    return %arg1, %c0_i32, %c0_i32_0 : i32, i32, i32
  }
  func.func @transform_8(%arg0: i32, %arg1: i32) -> (i32, i32, i32) {
    %c0_i32 = arith.constant 0 : i32
    %c0_i32_0 = arith.constant 0 : i32
    %c0_i32_1 = arith.constant 0 : i32
    return %arg1, %c0_i32, %c0_i32_0 : i32, i32, i32
  }
  func.func @transform_9(%arg0: i32, %arg1: i32) -> (i32, i32, i32) {
    %c0_i32 = arith.constant 0 : i32
    %c0_i32_0 = arith.constant 0 : i32
    %c0_i32_1 = arith.constant 0 : i32
    return %arg1, %c0_i32, %c0_i32_0 : i32, i32, i32
  }
  func.func @transform_10(%arg0: i32, %arg1: i32) -> (i32, i32, i32) {
    %c0_i32 = arith.constant 0 : i32
    %c0_i32_0 = arith.constant 0 : i32
    %c0_i32_1 = arith.constant 0 : i32
    return %arg1, %c0_i32, %c0_i32_0 : i32, i32, i32
  }
  func.func @transform_11(%arg0: i32, %arg1: i32) -> (i32, i32, i32) {
    %c0_i32 = arith.constant 0 : i32
    %c0_i32_0 = arith.constant 0 : i32
    %c0_i32_1 = arith.constant 0 : i32
    return %arg1, %c0_i32, %c0_i32_0 : i32, i32, i32
  }
  func.func @transform_12(%arg0: i32, %arg1: i32) -> (i32, i32, i32) {
    %c0_i32 = arith.constant 0 : i32
    %c0_i32_0 = arith.constant 0 : i32
    %c0_i32_1 = arith.constant 0 : i32
    return %arg1, %c0_i32, %c0_i32_0 : i32, i32, i32
  }
  func.func @transform_13(%arg0: i32, %arg1: i32) -> (i32, i32, i32) {
    %c0_i32 = arith.constant 0 : i32
    %c0_i32_0 = arith.constant 0 : i32
    %c0_i32_1 = arith.constant 0 : i32
    return %arg1, %c0_i32, %c0_i32_0 : i32, i32, i32
  }
  func.func @transform_14(%arg0: i32, %arg1: i32) -> (i32, i32, i32) {
    %c0_i32 = arith.constant 0 : i32
    %c0_i32_0 = arith.constant 0 : i32
    %c0_i32_1 = arith.constant 0 : i32
    return %arg1, %c0_i32, %c0_i32_0 : i32, i32, i32
  }
  func.func @transform_15(%arg0: i32, %arg1: i32) -> (i32, i32, i32) {
    %c0_i32 = arith.constant 0 : i32
    %c0_i32_0 = arith.constant 0 : i32
    %c0_i32_1 = arith.constant 0 : i32
    return %arg1, %c0_i32, %c0_i32_0 : i32, i32, i32
  }
  func.func @transform_16(%arg0: i32, %arg1: i32) -> (i32, i32, i32) {
    %c0_i32 = arith.constant 0 : i32
    %c0_i32_0 = arith.constant 0 : i32
    %c0_i32_1 = arith.constant 0 : i32
    return %arg1, %c0_i32, %c0_i32_0 : i32, i32, i32
  }
  func.func @transform_17(%arg0: i32, %arg1: i32) -> (i32, i32, i32) {
    %c0_i32 = arith.constant 0 : i32
    %c0_i32_0 = arith.constant 0 : i32
    %c0_i32_1 = arith.constant 0 : i32
    return %arg0, %c0_i32, %c0_i32_0 : i32, i32, i32
  }
}

</mosaic_0001>

<llo_original>
// kernel: tpu_custom_call.1
$region0: #{tpu_custom_call.1}
  #allocation0 [shape = 'u32[]', space=smem, size = 0x4, offset = 0x4, fixed_abs, tag = 'smem constant byte address 0x4 - core index']
  #allocation1 [shape = 'u32[144,128]{1,0:T(1,128)}', space=vmem, size = 0x12000, scoped, tag = 'internal scratch']
  #allocation2 [shape = 'f32[2,8,32]{2,1,0:T(8,128)}', space=vmem, size = 0x2000, scoped, tag = 'scratch operand']
  %s0 = inlined_call_operand.vmem [shape: f32[2,8,32], index: 0, kind: input, shape index: {}]
  %s1 = inlined_call_operand.vmem [shape: f32[8,32], index: 1, kind: input, shape index: {}]
  %s2 = inlined_call_operand.vmem [shape: f32[2,8], index: 2, kind: input, shape index: {}]
  %s3 = inlined_call_operand.vmem [shape: f32[1,32], index: 3, kind: input, shape index: {}]
  %s4 = inlined_call_operand.vmem [shape: f32[1,32], index: 4, kind: input, shape index: {}]
  %s5 = inlined_call_operand.vmem [shape: f32[2,1,32], index: 5, kind: input, shape index: {}]
  %s6 = inlined_call_operand.vmem [shape: f32[2,1,32], index: 6, kind: input, shape index: {}]
  %s7 = inlined_call_operand.vmem [shape: bf16[2,32,96], index: 7, kind: input, shape index: {}]
  %s8 = inlined_call_operand.vmem [shape: f32[2,1,96], index: 8, kind: input, shape index: {}]
  %s9 = inlined_call_operand.vmem [shape: bf16[2,32,32], index: 9, kind: input, shape index: {}]
  %s10 = inlined_call_operand.vmem [shape: f32[2,1,32], index: 10, kind: input, shape index: {}]
  %s11 = inlined_call_operand.vmem [shape: f32[2,1,32], index: 11, kind: input, shape index: {}]
  %s12 = inlined_call_operand.vmem [shape: f32[2,1,32], index: 12, kind: input, shape index: {}]
  %s13 = inlined_call_operand.vmem [shape: bf16[2,32,128], index: 13, kind: input, shape index: {}]
  %s14 = inlined_call_operand.vmem [shape: f32[2,1,128], index: 14, kind: input, shape index: {}]
  %s15 = inlined_call_operand.vmem [shape: bf16[2,128,32], index: 15, kind: input, shape index: {}]
  %s16 = inlined_call_operand.vmem [shape: f32[2,1,32], index: 16, kind: input, shape index: {}]
  %s17 = inlined_call_operand.hbm [shape: f32[2,8,32], index: 17, kind: output, shape index: {}]
  %s18 = sld [smem:[#allocation0]]
  $region109: #{tpu_custom_call.1} parent=0
    _
  %s20 = ssub.s32 1, %s18
  %s21 = scalar_select 0, %s20, %s18
  $region1: #{tpu_custom_call.1} parent=0
    #allocation3 [shape = 'u8[8192]{0}', space=vmem, size = 0x2000, scoped, tag = 'output window, operand 0, single buffered']
    #allocation4 [shape = 's32[2]{0}', space=sflag, size = 0x8, scoped, tag = 'scoped memory for tpu_custom_call.1']
    %22 = vsyncpa [#allocation4], 0
    loop: start=0, step=1, limit=4
    $region2: #{tpu_custom_call.1} parent=1 // loop_pre_header
      _
    $region3: #{tpu_custom_call.1} parent=1 // loop_header
      %s24 = sphi 0, %s28
      %p25 = scmp.ge.s32.totalorder %s24, 4
      %s31 = sphi 0, %s43
      %s32 = sphi 0, %s39
      %s33 = sphi 0, %s31
      %s34 = sphi 0, %s32
      %s35 = sphi 0, %s33
      %s36 = sphi 0, %s34
      %s46 = sphi 0, %s48
      %s49 = sphi 0, %s46
      %s50 = sphi 0, %s49
      %s66 = sphi 0, %s50
      %s70 = sphi 0, %s70
      %s72 = sphi 0, %s70
      %s73 = sphi 0, %s72
      %s87 = sphi 0, %s73
      %s93 = sphi 0, %s95
      %s96 = sphi 0, %s93
      %s97 = sphi 0, %s96
      %s113 = sphi 0, %s97
      %s117 = sphi 0, %s117
      %s119 = sphi 0, %s117
      %s120 = sphi 0, %s119
      %s134 = sphi 0, %s120
      %s138 = sphi 0, %s138
      %s140 = sphi 0, %s138
      %s141 = sphi 0, %s140
      %s155 = sphi 0, %s141
      %s161 = sphi 0, %s163
      %s164 = sphi 0, %s161
      %s165 = sphi 0, %s164
      %s181 = sphi 0, %s165
      %s187 = sphi 0, %s189
      %s190 = sphi 0, %s187
      %s191 = sphi 0, %s190
      %s207 = sphi 0, %s191
      %s213 = sphi 0, %s215
      %s216 = sphi 0, %s213
      %s217 = sphi 0, %s216
      %s233 = sphi 0, %s217
      %s239 = sphi 0, %s241
      %s242 = sphi 0, %s239
      %s243 = sphi 0, %s242
      %s259 = sphi 0, %s243
      %s265 = sphi 0, %s267
      %s268 = sphi 0, %s265
      %s269 = sphi 0, %s268
      %s285 = sphi 0, %s269
      %s291 = sphi 0, %s293
      %s294 = sphi 0, %s291
      %s295 = sphi 0, %s294
      %s311 = sphi 0, %s295
      %s317 = sphi 0, %s319
      %s320 = sphi 0, %s317
      %s321 = sphi 0, %s320
      %s337 = sphi 0, %s321
      %s343 = sphi 0, %s345
      %s346 = sphi 0, %s343
      %s347 = sphi 0, %s346
      %s363 = sphi 0, %s347
      %s369 = sphi 0, %s371
      %s372 = sphi 0, %s369
      %s373 = sphi 0, %s372
      %s389 = sphi 0, %s373
      %s395 = sphi 0, %s397
      %s398 = sphi 0, %s395
      %s399 = sphi 0, %s398
      %s415 = sphi 0, %s399
      %s421 = sphi 0, %s423
      %s424 = sphi 0, %s421
      %s425 = sphi 0, %s424
      %s441 = sphi 0, %s425
      %s447 = sphi 0, %s449
      %s450 = sphi 0, %s447
      %s451 = sphi 0, %s450
      %s467 = sphi 0, %s451
      %s473 = sphi 0, %s475
      %s476 = sphi 0, %s473
      %s477 = sphi 0, %s476
      %s493 = sphi 0, %s477
    $region4: #{tpu_custom_call.1} parent=1 // loop_header_branch
      %27 = sbr.rel (%p25) target = $region8
    $region5: #{tpu_custom_call.1} parent=1 // loop_body
      %s29 = ssub.s32 %s24, 1
      %s30 = ssub.s32 %s24, 2
      %s37 = sadd.s32 1, %s32
      %p38 = scmp.ge.s32.totalorder %s37, 2
      %s39 = scalar_select %p38, 0, %s37
      %s40 = sadd.s32 1, %s31
      %s41 = scalar_select %p38, %s40, %s31
      %p42 = scmp.ge.s32.totalorder %s41, 1
      %s43 = scalar_select %p42, 0, %s41
      %s44 = ssub.s32 %s31, %s43
      %p45 = scmp.eq.s32.totalorder %s44, 0
      %s47 = sadd.s32 %s46, 1
      %s48 = scalar_select %p45, %s46, %s47
      %p51 = pneg %p45
      %p52 = scmp.eq.s32.totalorder %s24, 1
      %p53 = por %p51, %p52
      %p54 = scmp.ne.s32.totalorder %s46, %s49
      %p55 = scmp.eq.s32.totalorder %s24, 0
      %p56 = por %p54, %p55
      %p57 = scmp.ne.s32.totalorder %s46, %s49
      %p58 = scmp.eq.s32.totalorder %s29, 1
      %p59 = por %p57, %p58
      %p60 = scmp.ne.s32.totalorder %s49, %s50
      %p61 = scmp.eq.s32.totalorder %s29, 0
      %p62 = por %p60, %p61
      %p63 = scmp.ne.s32.totalorder %s49, %s50
      %p64 = scmp.eq.s32.totalorder %s30, 1
      %p65 = por %p63, %p64
      %p67 = scmp.ne.s32.totalorder %s50, %s66
      %p68 = scmp.eq.s32.totalorder %s30, 0
      %p69 = por %p67, %p68
      %s71 = sadd.s32 %s70, 1
      %p74 = scmp.eq.s32.totalorder %s24, 1
      %p75 = scmp.ne.s32.totalorder %s70, %s72
      %p76 = scmp.eq.s32.totalorder %s24, 0
      %p77 = por %p75, %p76
      %p78 = scmp.ne.s32.totalorder %s70, %s72
      %p79 = scmp.eq.s32.totalorder %s29, 1
      %p80 = por %p78, %p79
      %p81 = scmp.ne.s32.totalorder %s72, %s73
      %p82 = scmp.eq.s32.totalorder %s29, 0
      %p83 = por %p81, %p82
      %p84 = scmp.ne.s32.totalorder %s72, %s73
      %p85 = scmp.eq.s32.totalorder %s30, 1
      %p86 = por %p84, %p85
      %p88 = scmp.ne.s32.totalorder %s73, %s87
      %p89 = scmp.eq.s32.totalorder %s30, 0
      %p90 = por %p88, %p89
      %s91 = ssub.s32 %s31, %s43
      %p92 = scmp.eq.s32.totalorder %s91, 0
      %s94 = sadd.s32 %s93, 1
      %s95 = scalar_select %p92, %s93, %s94
      %p98 = pneg %p92
      %p99 = scmp.eq.s32.totalorder %s24, 1
      %p100 = por %p98, %p99
      %p101 = scmp.ne.s32.totalorder %s93, %s96
      %p102 = scmp.eq.s32.totalorder %s24, 0
      %p103 = por %p101, %p102
      %p104 = scmp.ne.s32.totalorder %s93, %s96
      %p105 = scmp.eq.s32.totalorder %s29, 1
      %p106 = por %p104, %p105
      %p107 = scmp.ne.s32.totalorder %s96, %s97
      %p108 = scmp.eq.s32.totalorder %s29, 0
      %p109 = por %p107, %p108
      %p110 = scmp.ne.s32.totalorder %s96, %s97
      %p111 = scmp.eq.s32.totalorder %s30, 1
      %p112 = por %p110, %p111
      %p114 = scmp.ne.s32.totalorder %s97, %s113
      %p115 = scmp.eq.s32.totalorder %s30, 0
      %p116 = por %p114, %p115
      %s118 = sadd.s32 %s117, 1
      %p121 = scmp.eq.s32.totalorder %s24, 1
      %p122 = scmp.ne.s32.totalorder %s117, %s119
      %p123 = scmp.eq.s32.totalorder %s24, 0
      %p124 = por %p122, %p123
      %p125 = scmp.ne.s32.totalorder %s117, %s119
      %p126 = scmp.eq.s32.totalorder %s29, 1
      %p127 = por %p125, %p126
      %p128 = scmp.ne.s32.totalorder %s119, %s120
      %p129 = scmp.eq.s32.totalorder %s29, 0
      %p130 = por %p128, %p129
      %p131 = scmp.ne.s32.totalorder %s119, %s120
      %p132 = scmp.eq.s32.totalorder %s30, 1
      %p133 = por %p131, %p132
      %p135 = scmp.ne.s32.totalorder %s120, %s134
      %p136 = scmp.eq.s32.totalorder %s30, 0
      %p137 = por %p135, %p136
      %s139 = sadd.s32 %s138, 1
      %p142 = scmp.eq.s32.totalorder %s24, 1
      %p143 = scmp.ne.s32.totalorder %s138, %s140
      %p144 = scmp.eq.s32.totalorder %s24, 0
      %p145 = por %p143, %p144
      %p146 = scmp.ne.s32.totalorder %s138, %s140
      %p147 = scmp.eq.s32.totalorder %s29, 1
      %p148 = por %p146, %p147
      %p149 = scmp.ne.s32.totalorder %s140, %s141
      %p150 = scmp.eq.s32.totalorder %s29, 0
      %p151 = por %p149, %p150
      %p152 = scmp.ne.s32.totalorder %s140, %s141
      %p153 = scmp.eq.s32.totalorder %s30, 1
      %p154 = por %p152, %p153
      %p156 = scmp.ne.s32.totalorder %s141, %s155
      %p157 = scmp.eq.s32.totalorder %s30, 0
      %p158 = por %p156, %p157
      %s159 = ssub.s32 %s32, %s39
      %p160 = scmp.eq.s32.totalorder %s159, 0
      %s162 = sadd.s32 %s161, 1
      %s163 = scalar_select %p160, %s161, %s162
      %p166 = pneg %p160
      %p167 = scmp.eq.s32.totalorder %s24, 1
      %p168 = por %p166, %p167
      %p169 = scmp.ne.s32.totalorder %s161, %s164
      %p170 = scmp.eq.s32.totalorder %s24, 0
      %p171 = por %p169, %p170
      %p172 = scmp.ne.s32.totalorder %s161, %s164
      %p173 = scmp.eq.s32.totalorder %s29, 1
      %p174 = por %p172, %p173
      %p175 = scmp.ne.s32.totalorder %s164, %s165
      %p176 = scmp.eq.s32.totalorder %s29, 0
      %p177 = por %p175, %p176
      %p178 = scmp.ne.s32.totalorder %s164, %s165
      %p179 = scmp.eq.s32.totalorder %s30, 1
      %p180 = por %p178, %p179
      %p182 = scmp.ne.s32.totalorder %s165, %s181
      %p183 = scmp.eq.s32.totalorder %s30, 0
      %p184 = por %p182, %p183
      %s185 = ssub.s32 %s32, %s39
      %p186 = scmp.eq.s32.totalorder %s185, 0
      %s188 = sadd.s32 %s187, 1
      %s189 = scalar_select %p186, %s187, %s188
      %p192 = pneg %p186
      %p193 = scmp.eq.s32.totalorder %s24, 1
      %p194 = por %p192, %p193
      %p195 = scmp.ne.s32.totalorder %s187, %s190
      %p196 = scmp.eq.s32.totalorder %s24, 0
      %p197 = por %p195, %p196
      %p198 = scmp.ne.s32.totalorder %s187, %s190
      %p199 = scmp.eq.s32.totalorder %s29, 1
      %p200 = por %p198, %p199
      %p201 = scmp.ne.s32.totalorder %s190, %s191
      %p202 = scmp.eq.s32.totalorder %s29, 0
      %p203 = por %p201, %p202
      %p204 = scmp.ne.s32.totalorder %s190, %s191
      %p205 = scmp.eq.s32.totalorder %s30, 1
      %p206 = por %p204, %p205
      %p208 = scmp.ne.s32.totalorder %s191, %s207
      %p209 = scmp.eq.s32.totalorder %s30, 0
      %p210 = por %p208, %p209
      %s211 = ssub.s32 %s32, %s39
      %p212 = scmp.eq.s32.totalorder %s211, 0
      %s214 = sadd.s32 %s213, 1
      %s215 = scalar_select %p212, %s213, %s214
      %p218 = pneg %p212
      %p219 = scmp.eq.s32.totalorder %s24, 1
      %p220 = por %p218, %p219
      %p221 = scmp.ne.s32.totalorder %s213, %s216
      %p222 = scmp.eq.s32.totalorder %s24, 0
      %p223 = por %p221, %p222
      %p224 = scmp.ne.s32.totalorder %s213, %s216
      %p225 = scmp.eq.s32.totalorder %s29, 1
      %p226 = por %p224, %p225
      %p227 = scmp.ne.s32.totalorder %s216, %s217
      %p228 = scmp.eq.s32.totalorder %s29, 0
      %p229 = por %p227, %p228
      %p230 = scmp.ne.s32.totalorder %s216, %s217
      %p231 = scmp.eq.s32.totalorder %s30, 1
      %p232 = por %p230, %p231
      %p234 = scmp.ne.s32.totalorder %s217, %s233
      %p235 = scmp.eq.s32.totalorder %s30, 0
      %p236 = por %p234, %p235
      %s237 = ssub.s32 %s32, %s39
      %p238 = scmp.eq.s32.totalorder %s237, 0
      %s240 = sadd.s32 %s239, 1
      %s241 = scalar_select %p238, %s239, %s240
      %p244 = pneg %p238
      %p245 = scmp.eq.s32.totalorder %s24, 1
      %p246 = por %p244, %p245
      %p247 = scmp.ne.s32.totalorder %s239, %s242
      %p248 = scmp.eq.s32.totalorder %s24, 0
      %p249 = por %p247, %p248
      %p250 = scmp.ne.s32.totalorder %s239, %s242
      %p251 = scmp.eq.s32.totalorder %s29, 1
      %p252 = por %p250, %p251
      %p253 = scmp.ne.s32.totalorder %s242, %s243
      %p254 = scmp.eq.s32.totalorder %s29, 0
      %p255 = por %p253, %p254
      %p256 = scmp.ne.s32.totalorder %s242, %s243
      %p257 = scmp.eq.s32.totalorder %s30, 1
      %p258 = por %p256, %p257
      %p260 = scmp.ne.s32.totalorder %s243, %s259
      %p261 = scmp.eq.s32.totalorder %s30, 0
      %p262 = por %p260, %p261
      %s263 = ssub.s32 %s32, %s39
      %p264 = scmp.eq.s32.totalorder %s263, 0
      %s266 = sadd.s32 %s265, 1
      %s267 = scalar_select %p264, %s265, %s266
      %p270 = pneg %p264
      %p271 = scmp.eq.s32.totalorder %s24, 1
      %p272 = por %p270, %p271
      %p273 = scmp.ne.s32.totalorder %s265, %s268
      %p274 = scmp.eq.s32.totalorder %s24, 0
      %p275 = por %p273, %p274
      %p276 = scmp.ne.s32.totalorder %s265, %s268
      %p277 = scmp.eq.s32.totalorder %s29, 1
      %p278 = por %p276, %p277
      %p279 = scmp.ne.s32.totalorder %s268, %s269
      %p280 = scmp.eq.s32.totalorder %s29, 0
      %p281 = por %p279, %p280
      %p282 = scmp.ne.s32.totalorder %s268, %s269
      %p283 = scmp.eq.s32.totalorder %s30, 1
      %p284 = por %p282, %p283
      %p286 = scmp.ne.s32.totalorder %s269, %s285
      %p287 = scmp.eq.s32.totalorder %s30, 0
      %p288 = por %p286, %p287
      %s289 = ssub.s32 %s32, %s39
      %p290 = scmp.eq.s32.totalorder %s289, 0
      %s292 = sadd.s32 %s291, 1
      %s293 = scalar_select %p290, %s291, %s292
      %p296 = pneg %p290
      %p297 = scmp.eq.s32.totalorder %s24, 1
      %p298 = por %p296, %p297
      %p299 = scmp.ne.s32.totalorder %s291, %s294
      %p300 = scmp.eq.s32.totalorder %s24, 0
      %p301 = por %p299, %p300
      %p302 = scmp.ne.s32.totalorder %s291, %s294
      %p303 = scmp.eq.s32.totalorder %s29, 1
      %p304 = por %p302, %p303
      %p305 = scmp.ne.s32.totalorder %s294, %s295
      %p306 = scmp.eq.s32.totalorder %s29, 0
      %p307 = por %p305, %p306
      %p308 = scmp.ne.s32.totalorder %s294, %s295
      %p309 = scmp.eq.s32.totalorder %s30, 1
      %p310 = por %p308, %p309
      %p312 = scmp.ne.s32.totalorder %s295, %s311
      %p313 = scmp.eq.s32.totalorder %s30, 0
      %p314 = por %p312, %p313
      %s315 = ssub.s32 %s32, %s39
      %p316 = scmp.eq.s32.totalorder %s315, 0
      %s318 = sadd.s32 %s317, 1
      %s319 = scalar_select %p316, %s317, %s318
      %p322 = pneg %p316
      %p323 = scmp.eq.s32.totalorder %s24, 1
      %p324 = por %p322, %p323
      %p325 = scmp.ne.s32.totalorder %s317, %s320
      %p326 = scmp.eq.s32.totalorder %s24, 0
      %p327 = por %p325, %p326
      %p328 = scmp.ne.s32.totalorder %s317, %s320
      %p329 = scmp.eq.s32.totalorder %s29, 1
      %p330 = por %p328, %p329
      %p331 = scmp.ne.s32.totalorder %s320, %s321
      %p332 = scmp.eq.s32.totalorder %s29, 0
      %p333 = por %p331, %p332
      %p334 = scmp.ne.s32.totalorder %s320, %s321
      %p335 = scmp.eq.s32.totalorder %s30, 1
      %p336 = por %p334, %p335
      %p338 = scmp.ne.s32.totalorder %s321, %s337
      %p339 = scmp.eq.s32.totalorder %s30, 0
      %p340 = por %p338, %p339
      %s341 = ssub.s32 %s32, %s39
      %p342 = scmp.eq.s32.totalorder %s341, 0
      %s344 = sadd.s32 %s343, 1
      %s345 = scalar_select %p342, %s343, %s344
      %p348 = pneg %p342
      %p349 = scmp.eq.s32.totalorder %s24, 1
      %p350 = por %p348, %p349
      %p351 = scmp.ne.s32.totalorder %s343, %s346
      %p352 = scmp.eq.s32.totalorder %s24, 0
      %p353 = por %p351, %p352
      %p354 = scmp.ne.s32.totalorder %s343, %s346
      %p355 = scmp.eq.s32.totalorder %s29, 1
      %p356 = por %p354, %p355
      %p357 = scmp.ne.s32.totalorder %s346, %s347
      %p358 = scmp.eq.s32.totalorder %s29, 0
      %p359 = por %p357, %p358
      %p360 = scmp.ne.s32.totalorder %s346, %s347
      %p361 = scmp.eq.s32.totalorder %s30, 1
      %p362 = por %p360, %p361
      %p364 = scmp.ne.s32.totalorder %s347, %s363
      %p365 = scmp.eq.s32.totalorder %s30, 0
      %p366 = por %p364, %p365
      %s367 = ssub.s32 %s32, %s39
      %p368 = scmp.eq.s32.totalorder %s367, 0
      %s370 = sadd.s32 %s369, 1
      %s371 = scalar_select %p368, %s369, %s370
      %p374 = pneg %p368
      %p375 = scmp.eq.s32.totalorder %s24, 1
      %p376 = por %p374, %p375
      %p377 = scmp.ne.s32.totalorder %s369, %s372
      %p378 = scmp.eq.s32.totalorder %s24, 0
      %p379 = por %p377, %p378
      %p380 = scmp.ne.s32.totalorder %s369, %s372
      %p381 = scmp.eq.s32.totalorder %s29, 1
      %p382 = por %p380, %p381
      %p383 = scmp.ne.s32.totalorder %s372, %s373
      %p384 = scmp.eq.s32.totalorder %s29, 0
      %p385 = por %p383, %p384
      %p386 = scmp.ne.s32.totalorder %s372, %s373
      %p387 = scmp.eq.s32.totalorder %s30, 1
      %p388 = por %p386, %p387
      %p390 = scmp.ne.s32.totalorder %s373, %s389
      %p391 = scmp.eq.s32.totalorder %s30, 0
      %p392 = por %p390, %p391
      %s393 = ssub.s32 %s32, %s39
      %p394 = scmp.eq.s32.totalorder %s393, 0
      %s396 = sadd.s32 %s395, 1
      %s397 = scalar_select %p394, %s395, %s396
      %p400 = pneg %p394
      %p401 = scmp.eq.s32.totalorder %s24, 1
      %p402 = por %p400, %p401
      %p403 = scmp.ne.s32.totalorder %s395, %s398
      %p404 = scmp.eq.s32.totalorder %s24, 0
      %p405 = por %p403, %p404
      %p406 = scmp.ne.s32.totalorder %s395, %s398
      %p407 = scmp.eq.s32.totalorder %s29, 1
      %p408 = por %p406, %p407
      %p409 = scmp.ne.s32.totalorder %s398, %s399
      %p410 = scmp.eq.s32.totalorder %s29, 0
      %p411 = por %p409, %p410
      %p412 = scmp.ne.s32.totalorder %s398, %s399
      %p413 = scmp.eq.s32.totalorder %s30, 1
      %p414 = por %p412, %p413
      %p416 = scmp.ne.s32.totalorder %s399, %s415
      %p417 = scmp.eq.s32.totalorder %s30, 0
      %p418 = por %p416, %p417
      %s419 = ssub.s32 %s32, %s39
      %p420 = scmp.eq.s32.totalorder %s419, 0
      %s422 = sadd.s32 %s421, 1
      %s423 = scalar_select %p420, %s421, %s422
      %p426 = pneg %p420
      %p427 = scmp.eq.s32.totalorder %s24, 1
      %p428 = por %p426, %p427
      %p429 = scmp.ne.s32.totalorder %s421, %s424
      %p430 = scmp.eq.s32.totalorder %s24, 0
      %p431 = por %p429, %p430
      %p432 = scmp.ne.s32.totalorder %s421, %s424
      %p433 = scmp.eq.s32.totalorder %s29, 1
      %p434 = por %p432, %p433
      %p435 = scmp.ne.s32.totalorder %s424, %s425
      %p436 = scmp.eq.s32.totalorder %s29, 0
      %p437 = por %p435, %p436
      %p438 = scmp.ne.s32.totalorder %s424, %s425
      %p439 = scmp.eq.s32.totalorder %s30, 1
      %p440 = por %p438, %p439
      %p442 = scmp.ne.s32.totalorder %s425, %s441
      %p443 = scmp.eq.s32.totalorder %s30, 0
      %p444 = por %p442, %p443
      %s445 = ssub.s32 %s32, %s39
      %p446 = scmp.eq.s32.totalorder %s445, 0
      %s448 = sadd.s32 %s447, 1
      %s449 = scalar_select %p446, %s447, %s448
      %p452 = pneg %p446
      %p453 = scmp.eq.s32.totalorder %s24, 1
      %p454 = por %p452, %p453
      %p455 = scmp.ne.s32.totalorder %s447, %s450
      %p456 = scmp.eq.s32.totalorder %s24, 0
      %p457 = por %p455, %p456
      %p458 = scmp.ne.s32.totalorder %s447, %s450
      %p459 = scmp.eq.s32.totalorder %s29, 1
      %p460 = por %p458, %p459
      %p461 = scmp.ne.s32.totalorder %s450, %s451
      %p462 = scmp.eq.s32.totalorder %s29, 0
      %p463 = por %p461, %p462
      %p464 = scmp.ne.s32.totalorder %s450, %s451
      %p465 = scmp.eq.s32.totalorder %s30, 1
      %p466 = por %p464, %p465
      %p468 = scmp.ne.s32.totalorder %s451, %s467
      %p469 = scmp.eq.s32.totalorder %s30, 0
      %p470 = por %p468, %p469
      %s471 = ssub.s32 %s31, %s43
      %p472 = scmp.eq.s32.totalorder %s471, 0
      %s474 = sadd.s32 %s473, 1
      %s475 = scalar_select %p472, %s473, %s474
      %p478 = pneg %p472
      %p479 = scmp.eq.s32.totalorder %s24, 1
      %p480 = por %p478, %p479
      %p481 = scmp.ne.s32.totalorder %s473, %s476
      %p482 = scmp.eq.s32.totalorder %s24, 0
      %p483 = por %p481, %p482
      %p484 = scmp.ne.s32.totalorder %s473, %s476
      %p485 = scmp.eq.s32.totalorder %s29, 1
      %p486 = por %p484, %p485
      %p487 = scmp.ne.s32.totalorder %s476, %s477
      %p488 = scmp.eq.s32.totalorder %s29, 0
      %p489 = por %p487, %p488
      %p490 = scmp.ne.s32.totalorder %s476, %s477
      %p491 = scmp.eq.s32.totalorder %s30, 1
      %p492 = por %p490, %p491
      %p494 = scmp.ne.s32.totalorder %s477, %s493
      %p495 = scmp.eq.s32.totalorder %s30, 0
      %p496 = por %p494, %p495
      %p497 = scmp.le.s32.totalorder 1, %s24
      %p498 = scmp.lt.s32.totalorder %s24, 3
      %p499 = pnand %p497, %p498
      %p500 = pneg %p499
      // Predicated region
      $region9: #{tpu_custom_call.1} parent=5 // pred_check
        _
      $region10: #{tpu_custom_call.1} parent=5 // pred_check_branch
        %502 = sbr.rel (%p499) target = $region12
      $region11: #{tpu_custom_call.1} parent=5 // pred_region
        %s503 = ssub.s32 %s24, 1
        // Predicated region
        $region13: #{tpu_custom_call.1} parent=11 // pred_check
          %p504 = pneg %p62
        $region14: #{tpu_custom_call.1} parent=11 // pred_check_branch
          %506 = sbr.rel (%p504) target = $region16
        $region15: #{tpu_custom_call.1} parent=11 // pred_region
          %s507 = smul.u32 2, %s33
          %p508 = scmp.lt.s32.totalorder %s507, 1
          %s509 = scalar_select %p508, %s507, 1
          %s510 = smul.addr %s509, 8
          %s511 = scalar_lea.vmem %s0, %s510
          %s512 = smul.u32 2, %s33
        $region16: #{tpu_custom_call.1} parent=11 // pred_fallthru
          _
        // Predicated region
        $region17: #{tpu_custom_call.1} parent=11 // pred_check
          %p513 = pneg %p83
        $region18: #{tpu_custom_call.1} parent=11 // pred_check_branch
          %515 = sbr.rel (%p513) target = $region20
        $region19: #{tpu_custom_call.1} parent=11 // pred_region
          _
        $region20: #{tpu_custom_call.1} parent=11 // pred_fallthru
          _
        // Predicated region
        $region21: #{tpu_custom_call.1} parent=11 // pred_check
          %p516 = pneg %p109
        $region22: #{tpu_custom_call.1} parent=11 // pred_check_branch
          %518 = sbr.rel (%p516) target = $region24
        $region23: #{tpu_custom_call.1} parent=11 // pred_region
          %p519 = scmp.lt.s32.totalorder %s33, 0
          %s520 = scalar_select %p519, %s33, 0
          %s521 = smul.addr %s520, 2
          %s522 = scalar_lea.vmem %s2, %s521
        $region24: #{tpu_custom_call.1} parent=11 // pred_fallthru
          _
        // Predicated region
        $region25: #{tpu_custom_call.1} parent=11 // pred_check
          %p523 = pneg %p130
        $region26: #{tpu_custom_call.1} parent=11 // pred_check_branch
          %525 = sbr.rel (%p523) target = $region28
        $region27: #{tpu_custom_call.1} parent=11 // pred_region
          _
        $region28: #{tpu_custom_call.1} parent=11 // pred_fallthru
          _
        // Predicated region
        $region29: #{tpu_custom_call.1} parent=11 // pred_check
          %p526 = pneg %p151
        $region30: #{tpu_custom_call.1} parent=11 // pred_check_branch
          %528 = sbr.rel (%p526) target = $region32
        $region31: #{tpu_custom_call.1} parent=11 // pred_region
          _
        $region32: #{tpu_custom_call.1} parent=11 // pred_fallthru
          _
      $region12: #{tpu_custom_call.1} parent=5 // pred_fallthru
        _
      %p529 = scmp.lt.s32.totalorder %s24, 2
      // Predicated region
      $region33: #{tpu_custom_call.1} parent=5 // pred_check
        %p530 = pneg %p529
      $region34: #{tpu_custom_call.1} parent=5 // pred_check_branch
        %532 = sbr.rel (%p530) target = $region36
      $region35: #{tpu_custom_call.1} parent=5 // pred_region
        // Predicated region
        $region37: #{tpu_custom_call.1} parent=35 // pred_check
          %p533 = pneg %p171
        $region38: #{tpu_custom_call.1} parent=35 // pred_check_branch
          %535 = sbr.rel (%p533) target = $region40
        $region39: #{tpu_custom_call.1} parent=35 // pred_region
          %p536 = scmp.lt.s32.totalorder %s32, 1
          %s537 = scalar_select %p536, %s32, 1
          %s538 = scalar_lea.vmem %s5, %s537
        $region40: #{tpu_custom_call.1} parent=35 // pred_fallthru
          _
        // Predicated region
        $region41: #{tpu_custom_call.1} parent=35 // pred_check
          %p539 = pneg %p197
        $region42: #{tpu_custom_call.1} parent=35 // pred_check_branch
          %541 = sbr.rel (%p539) target = $region44
        $region43: #{tpu_custom_call.1} parent=35 // pred_region
          %p542 = scmp.lt.s32.totalorder %s32, 1
          %s543 = scalar_select %p542, %s32, 1
          %s544 = scalar_lea.vmem %s6, %s543
        $region44: #{tpu_custom_call.1} parent=35 // pred_fallthru
          _
        // Predicated region
        $region45: #{tpu_custom_call.1} parent=35 // pred_check
          %p545 = pneg %p223
        $region46: #{tpu_custom_call.1} parent=35 // pred_check_branch
          %547 = sbr.rel (%p545) target = $region48
        $region47: #{tpu_custom_call.1} parent=35 // pred_region
          %p548 = scmp.lt.s32.totalorder %s32, 1
          %s549 = scalar_select %p548, %s32, 1
          %s550 = smul.addr %s549, 4
          %s551 = smul.addr %s550, 4
          %s552 = scalar_lea.vmem %s7, %s551
        $region48: #{tpu_custom_call.1} parent=35 // pred_fallthru
          _
        // Predicated region
        $region49: #{tpu_custom_call.1} parent=35 // pred_check
          %p553 = pneg %p249
        $region50: #{tpu_custom_call.1} parent=35 // pred_check_branch
          %555 = sbr.rel (%p553) target = $region52
        $region51: #{tpu_custom_call.1} parent=35 // pred_region
          %p556 = scmp.lt.s32.totalorder %s32, 1
          %s557 = scalar_select %p556, %s32, 1
          %s558 = scalar_lea.vmem %s8, %s557
        $region52: #{tpu_custom_call.1} parent=35 // pred_fallthru
          _
        // Predicated region
        $region53: #{tpu_custom_call.1} parent=35 // pred_check
          %p559 = pneg %p275
        $region54: #{tpu_custom_call.1} parent=35 // pred_check_branch
          %561 = sbr.rel (%p559) target = $region56
        $region55: #{tpu_custom_call.1} parent=35 // pred_region
          %p562 = scmp.lt.s32.totalorder %s32, 1
          %s563 = scalar_select %p562, %s32, 1
          %s564 = smul.addr %s563, 4
          %s565 = smul.addr %s564, 4
          %s566 = scalar_lea.vmem %s9, %s565
        $region56: #{tpu_custom_call.1} parent=35 // pred_fallthru
          _
        // Predicated region
        $region57: #{tpu_custom_call.1} parent=35 // pred_check
          %p567 = pneg %p301
        $region58: #{tpu_custom_call.1} parent=35 // pred_check_branch
          %569 = sbr.rel (%p567) target = $region60
        $region59: #{tpu_custom_call.1} parent=35 // pred_region
          %p570 = scmp.lt.s32.totalorder %s32, 1
          %s571 = scalar_select %p570, %s32, 1
          %s572 = scalar_lea.vmem %s10, %s571
        $region60: #{tpu_custom_call.1} parent=35 // pred_fallthru
          _
        // Predicated region
        $region61: #{tpu_custom_call.1} parent=35 // pred_check
          %p573 = pneg %p327
        $region62: #{tpu_custom_call.1} parent=35 // pred_check_branch
          %575 = sbr.rel (%p573) target = $region64
        $region63: #{tpu_custom_call.1} parent=35 // pred_region
          %p576 = scmp.lt.s32.totalorder %s32, 1
          %s577 = scalar_select %p576, %s32, 1
          %s578 = scalar_lea.vmem %s11, %s577
        $region64: #{tpu_custom_call.1} parent=35 // pred_fallthru
          _
        // Predicated region
        $region65: #{tpu_custom_call.1} parent=35 // pred_check
          %p579 = pneg %p353
        $region66: #{tpu_custom_call.1} parent=35 // pred_check_branch
          %581 = sbr.rel (%p579) target = $region68
        $region67: #{tpu_custom_call.1} parent=35 // pred_region
          %p582 = scmp.lt.s32.totalorder %s32, 1
          %s583 = scalar_select %p582, %s32, 1
          %s584 = scalar_lea.vmem %s12, %s583
        $region68: #{tpu_custom_call.1} parent=35 // pred_fallthru
          _
        // Predicated region
        $region69: #{tpu_custom_call.1} parent=35 // pred_check
          %p585 = pneg %p379
        $region70: #{tpu_custom_call.1} parent=35 // pred_check_branch
          %587 = sbr.rel (%p585) target = $region72
        $region71: #{tpu_custom_call.1} parent=35 // pred_region
          %p588 = scmp.lt.s32.totalorder %s32, 1
          %s589 = scalar_select %p588, %s32, 1
          %s590 = smul.addr %s589, 4
          %s591 = smul.addr %s590, 4
          %s592 = scalar_lea.vmem %s13, %s591
        $region72: #{tpu_custom_call.1} parent=35 // pred_fallthru
          _
        // Predicated region
        $region73: #{tpu_custom_call.1} parent=35 // pred_check
          %p593 = pneg %p405
        $region74: #{tpu_custom_call.1} parent=35 // pred_check_branch
          %595 = sbr.rel (%p593) target = $region76
        $region75: #{tpu_custom_call.1} parent=35 // pred_region
          %p596 = scmp.lt.s32.totalorder %s32, 1
          %s597 = scalar_select %p596, %s32, 1
          %s598 = scalar_lea.vmem %s14, %s597
        $region76: #{tpu_custom_call.1} parent=35 // pred_fallthru
          _
        // Predicated region
        $region77: #{tpu_custom_call.1} parent=35 // pred_check
          %p599 = pneg %p431
        $region78: #{tpu_custom_call.1} parent=35 // pred_check_branch
          %601 = sbr.rel (%p599) target = $region80
        $region79: #{tpu_custom_call.1} parent=35 // pred_region
          %p602 = scmp.lt.s32.totalorder %s32, 1
          %s603 = scalar_select %p602, %s32, 1
          %s604 = smul.addr %s603, 16
          %s605 = smul.addr %s604, 4
          %s606 = scalar_lea.vmem %s15, %s605
        $region80: #{tpu_custom_call.1} parent=35 // pred_fallthru
          _
        // Predicated region
        $region81: #{tpu_custom_call.1} parent=35 // pred_check
          %p607 = pneg %p457
        $region82: #{tpu_custom_call.1} parent=35 // pred_check_branch
          %609 = sbr.rel (%p607) target = $region84
        $region83: #{tpu_custom_call.1} parent=35 // pred_region
          %p610 = scmp.lt.s32.totalorder %s32, 1
          %s611 = scalar_select %p610, %s32, 1
          %s612 = scalar_lea.vmem %s16, %s611
        $region84: #{tpu_custom_call.1} parent=35 // pred_fallthru
          _
      $region36: #{tpu_custom_call.1} parent=5 // pred_fallthru
        _
      %p613 = scmp.le.s32.totalorder 1, %s24
      %p614 = scmp.lt.s32.totalorder %s24, 3
      %p615 = pnand %p613, %p614
      %p616 = pneg %p615
      // Predicated region
      $region85: #{tpu_custom_call.1} parent=5 // pred_check
        _
      $region86: #{tpu_custom_call.1} parent=5 // pred_check_branch
        %618 = sbr.rel (%p615) target = $region88
      $region87: #{tpu_custom_call.1} parent=5 // pred_region
        %s619 = ssub.s32 %s24, 1
        %s620 = smul.u32 2, %s33
        %p621 = scmp.lt.s32.totalorder %s620, 1
        %s622 = scalar_select %p621, %s620, 1
        %s623 = smul.addr %s622, 8
        %s624 = scalar_lea.vmem %s0, %s623
        %p625 = pneg %p62
        %p626 = pneg %p59
        %p627 = pneg %p83
        %p628 = pneg %p80
        %p629 = scmp.lt.s32.totalorder %s33, 0
        %s630 = scalar_select %p629, %s33, 0
        %s631 = smul.addr %s630, 2
        %s632 = scalar_lea.vmem %s2, %s631
        %p633 = pneg %p109
        %p634 = pneg %p106
        %p635 = pneg %p130
        %p636 = pneg %p127
        %p637 = pneg %p151
        %p638 = pneg %p148
        %p639 = scmp.lt.s32.totalorder %s34, 1
        %s640 = scalar_select %p639, %s34, 1
        %s641 = scalar_lea.vmem %s5, %s640
        %p642 = pneg %p177
        %p643 = pneg %p174
        %p644 = scmp.lt.s32.totalorder %s34, 1
        %s645 = scalar_select %p644, %s34, 1
        %s646 = scalar_lea.vmem %s6, %s645
        %p647 = pneg %p203
        %p648 = pneg %p200
        %p649 = scmp.lt.s32.totalorder %s34, 1
        %s650 = scalar_select %p649, %s34, 1
        %s651 = smul.addr %s650, 4
        %s652 = smul.addr %s651, 4
        %s653 = scalar_lea.vmem %s7, %s652
        %p654 = pneg %p229
        %p655 = pneg %p226
        %p656 = scmp.lt.s32.totalorder %s34, 1
        %s657 = scalar_select %p656, %s34, 1
        %s658 = scalar_lea.vmem %s8, %s657
        %p659 = pneg %p255
        %p660 = pneg %p252
        %p661 = scmp.lt.s32.totalorder %s34, 1
        %s662 = scalar_select %p661, %s34, 1
        %s663 = smul.addr %s662, 4
        %s664 = smul.addr %s663, 4
        %s665 = scalar_lea.vmem %s9, %s664
        %p666 = pneg %p281
        %p667 = pneg %p278
        %p668 = scmp.lt.s32.totalorder %s34, 1
        %s669 = scalar_select %p668, %s34, 1
        %s670 = scalar_lea.vmem %s10, %s669
        %p671 = pneg %p307
        %p672 = pneg %p304
        %p673 = scmp.lt.s32.totalorder %s34, 1
        %s674 = scalar_select %p673, %s34, 1
        %s675 = scalar_lea.vmem %s11, %s674
        %p676 = pneg %p333
        %p677 = pneg %p330
        %p678 = scmp.lt.s32.totalorder %s34, 1
        %s679 = scalar_select %p678, %s34, 1
        %s680 = scalar_lea.vmem %s12, %s679
        %p681 = pneg %p359
        %p682 = pneg %p356
        %p683 = scmp.lt.s32.totalorder %s34, 1
        %s684 = scalar_select %p683, %s34, 1
        %s685 = smul.addr %s684, 4
        %s686 = smul.addr %s685, 4
        %s687 = scalar_lea.vmem %s13, %s686
        %p688 = pneg %p385
        %p689 = pneg %p382
        %p690 = scmp.lt.s32.totalorder %s34, 1
        %s691 = scalar_select %p690, %s34, 1
        %s692 = scalar_lea.vmem %s14, %s691
        %p693 = pneg %p411
        %p694 = pneg %p408
        %p695 = scmp.lt.s32.totalorder %s34, 1
        %s696 = scalar_select %p695, %s34, 1
        %s697 = smul.addr %s696, 16
        %s698 = smul.addr %s697, 4
        %s699 = scalar_lea.vmem %s15, %s698
        %p700 = pneg %p437
        %p701 = pneg %p434
        %p702 = scmp.lt.s32.totalorder %s34, 1
        %s703 = scalar_select %p702, %s34, 1
        %s704 = scalar_lea.vmem %s16, %s703
        %p705 = pneg %p463
        %p706 = pneg %p460
        %p707 = pneg %p489
        %p708 = pneg %p486
        %s709 = smul.u32 2, %s33
        %p710 = scmp.lt.s32.totalorder %s709, 1
        %s711 = scalar_select %p710, %s709, 1
        %s712 = smul.addr %s711, 8
        %s713 = scalar_lea.vmem %s0, %s712
        %s714 = smul.u32 2, %s33
        %p715 = scmp.lt.s32.totalorder %s33, 0
        %s716 = scalar_select %p715, %s33, 0
        %s717 = smul.addr %s716, 2
        %s718 = scalar_lea.vmem %s2, %s717
        %p719 = scmp.lt.s32.totalorder %s34, 1
        %s720 = scalar_select %p719, %s34, 1
        %s721 = scalar_lea.vmem %s5, %s720
        %p722 = scmp.lt.s32.totalorder %s34, 1
        %s723 = scalar_select %p722, %s34, 1
        %s724 = scalar_lea.vmem %s6, %s723
        %p725 = scmp.lt.s32.totalorder %s34, 1
        %s726 = scalar_select %p725, %s34, 1
        %s727 = smul.addr %s726, 4
        %s728 = smul.addr %s727, 4
        %s729 = scalar_lea.vmem %s7, %s728
        %p730 = scmp.lt.s32.totalorder %s34, 1
        %s731 = scalar_select %p730, %s34, 1
        %s732 = scalar_lea.vmem %s8, %s731
        %p733 = scmp.lt.s32.totalorder %s34, 1
        %s734 = scalar_select %p733, %s34, 1
        %s735 = smul.addr %s734, 4
        %s736 = smul.addr %s735, 4
        %s737 = scalar_lea.vmem %s9, %s736
        %p738 = scmp.lt.s32.totalorder %s34, 1
        %s739 = scalar_select %p738, %s34, 1
        %s740 = scalar_lea.vmem %s10, %s739
        %p741 = scmp.lt.s32.totalorder %s34, 1
        %s742 = scalar_select %p741, %s34, 1
        %s743 = scalar_lea.vmem %s11, %s742
        %p744 = scmp.lt.s32.totalorder %s34, 1
        %s745 = scalar_select %p744, %s34, 1
        %s746 = scalar_lea.vmem %s12, %s745
        %p747 = scmp.lt.s32.totalorder %s34, 1
        %s748 = scalar_select %p747, %s34, 1
        %s749 = smul.addr %s748, 4
        %s750 = smul.addr %s749, 4
        %s751 = scalar_lea.vmem %s13, %s750
        %p752 = scmp.lt.s32.totalorder %s34, 1
        %s753 = scalar_select %p752, %s34, 1
        %s754 = scalar_lea.vmem %s14, %s753
        %p755 = scmp.lt.s32.totalorder %s34, 1
        %s756 = scalar_select %p755, %s34, 1
        %s757 = smul.addr %s756, 16
        %s758 = smul.addr %s757, 4
        %s759 = scalar_lea.vmem %s15, %s758
        %p760 = scmp.lt.s32.totalorder %s34, 1
        %s761 = scalar_select %p760, %s34, 1
        %s762 = scalar_lea.vmem %s16, %s761
        %s763 = smul.u32 2, %s33
        %p765 = scmp.eq.s32.totalorder %s34, 0
        // Predicated region
        $region89: #{tpu_custom_call.1} parent=87 // pred_check
          %p766 = pneg %p765
        $region90: #{tpu_custom_call.1} parent=87 // pred_check_branch
          %768 = sbr.rel (%p766) target = $region92
        $region91: #{tpu_custom_call.1} parent=87 // pred_region
          %v769 = vld [vmem:[%s713] sm:$0xff]
          %v770 = vld [vmem:[%s713 + $0x8] sm:$0xff]
          %v771 = vld [vmem:[%s1] sm:$0xff]
          %v772 = vadd.f32 %v769, %v771
          %v773 = vadd.f32 %v770, %v771
          %v774 = vld [vmem:[%s3] sm:$0x1]
          %v775 = vld [vmem:[%s4] sm:$0x1]
          %vm776 = vcmask 261120
          %v777 = vsel %vm776, %v772, 0.0
          %778 = vadd.xlane.f32.xlu0 %v777
          %v779 = vpop.xlane.xlu0 %778
          %v780 = vsel %vm776, %v773, 0.0
          %781 = vadd.xlane.f32.xlu0 %v780
          %v782 = vpop.xlane.xlu0 %781
          %v783 = vrcp.pop 32.0
          %v784 = vmul.f32 %v779, %v783
          %v785 = vmul.f32 %v782, %v783
          %v786 = vsub.f32 %v772, %v784
          %v787 = vsub.f32 %v773, %v785
          %v788 = vmul.f32 %v786, %v786
          %v789 = vmul.f32 %v787, %v787
          %v790 = vsel %vm776, %v788, 0.0
          %791 = vadd.xlane.f32.xlu0 %v790
          %v792 = vpop.xlane.xlu0 %791
          %v793 = vsel %vm776, %v789, 0.0
          %794 = vadd.xlane.f32.xlu0 %v793
          %v795 = vpop.xlane.xlu0 %794
          %v796 = vmul.f32 %v792, %v783
          %v797 = vmul.f32 %v795, %v783
          %v798 = vadd.f32 %v796, 1e-05
          %v799 = vadd.f32 %v797, 1e-05
          %v800 = vrsqrt.pop %v798
          %v801 = vrsqrt.pop %v799
          %v802 = vmul.f32 %v786, %v800
          %v803 = vmul.f32 %v787, %v801
          %v805 = vlaneseq
          %v806 = vshrl.u32 %v805, 7
          %v807 = vsub.s32 0, %v806
          %v808 = vrot.slane %v774, %v807
          %v810 = vmul.f32 %v802, %v808
          %v811 = vmul.f32 %v803, %v808
          %v813 = vlaneseq
          %v814 = vshrl.u32 %v813, 7
          %v815 = vsub.s32 0, %v814
          %v816 = vrot.slane %v775, %v815
          %v818 = vadd.f32 %v810, %v816
          %v819 = vadd.f32 %v811, %v816
          %820 = vst.msk [vmem:[#allocation2] sm:$0xff] %vm776, %v818
          %821 = vst.msk [vmem:[#allocation2 + $0x8] sm:$0xff] %vm776, %v819
        $region92: #{tpu_custom_call.1} parent=87 // pred_fallthru
          _
        %v822 = vld [vmem:[%s718] sm:$0x3]
        %vm823 = vcmp.ne.f32.partialorder %v822, 0.0
        %v824 = vlaneseq
        %v825 = vshrl.u32 %v824, 7
        %v826 = vlaneseq
        %v827 = vand.u32 %v826, 127
        %vm828 = vcmp.le.s32.totalorder %v827, %v825
        %v829 = vsel %vm823, 1, 0
        %v831 = vunpack.c.l.s4 1966171168
        %v832 = vunpack.c.0.s8 %v831
        %v833 = vlaneseq
        %v834 = vshrl.u32 %v833, 7
        %v835 = vsub.s32 %v832, %v834
        %v836 = vrot.slane %v829, %v835
        %v837 = vcombine.high %v836, %v836
        %v839 = vunpack.c.l.s4 1966171168
        %v840 = vunpack.c.0.s8 %v839
        %v841 = vlaneseq
        %v842 = vshrl.u32 %v841, 7
        %v843 = vsub.s32 %v840, %v842
        %v844 = vrot.slane %v836, %v843
        %v846 = vunpack.c.l.s4 1966171168
        %v847 = vunpack.c.0.s8 %v846
        %v848 = vlaneseq
        %v849 = vshrl.u32 %v848, 7
        %v850 = vsub.s32 %v847, %v849
        %v851 = vrot.slane %v837, %v850
        %vm852 = vcmp.ne.s32.totalorder %v844, 0
        %vm853 = vcmp.ne.s32.totalorder %v851, 0
        %v854 = vsel %vm852, 1, 0
        %v855 = vsel %vm853, 1, 0
        %v856 = vlaneseq
        %v857 = vshrl.u32 %v856, 7
        %v858 = vsub.s32 0, %v857
        %v859 = vrot.slane %v854, %v858
        %v860 = vlaneseq
        %v861 = vshrl.u32 %v860, 7
        %v862 = vsub.s32 0, %v861
        %v863 = vrot.slane %v855, %v862
        %vm864 = vcmp.eq.s32.totalorder %v859, 1
        %vm865 = vcmp.eq.s32.totalorder %v863, 1
        %v866 = vsel %vm828, 1, 0
        %vm867 = vcmp.eq.s32.totalorder %v866, 1
        %vm868 = vmand %vm864, %vm867
        %vm869 = vmand %vm865, %vm867
        %v870 = vsel %vm868, 0.0, -1e+09
        %v871 = vsel %vm869, 0.0, -1e+09
        %v872 = vld [vmem:[#allocation2] sm:$0xff]
        %v873 = vld [vmem:[#allocation2 + $0x8] sm:$0xff]
        %v874 = vld [vmem:[%s721] sm:$0x1]
        %v875 = vld [vmem:[%s724] sm:$0x1]
        %vm876 = vcmask 261120
        %v877 = vsel %vm876, %v872, 0.0
        %878 = vadd.xlane.f32.xlu0 %v877
        %v879 = vpop.xlane.xlu0 %878
        %v880 = vsel %vm876, %v873, 0.0
        %881 = vadd.xlane.f32.xlu0 %v880
        %v882 = vpop.xlane.xlu0 %881
        %v883 = vrcp.pop 32.0
        %v884 = vmul.f32 %v879, %v883
        %v885 = vmul.f32 %v882, %v883
        %v886 = vsub.f32 %v872, %v884
        %v887 = vsub.f32 %v873, %v885
        %v888 = vmul.f32 %v886, %v886
        %v889 = vmul.f32 %v887, %v887
        %v890 = vsel %vm876, %v888, 0.0
        %891 = vadd.xlane.f32.xlu0 %v890
        %v892 = vpop.xlane.xlu0 %891
        %v893 = vsel %vm876, %v889, 0.0
        %894 = vadd.xlane.f32.xlu0 %v893
        %v895 = vpop.xlane.xlu0 %894
        %v896 = vmul.f32 %v892, %v883
        %v897 = vmul.f32 %v895, %v883
        %v898 = vadd.f32 %v896, 1e-05
        %v899 = vadd.f32 %v897, 1e-05
        %v900 = vrsqrt.pop %v898
        %v901 = vrsqrt.pop %v899
        %v902 = vmul.f32 %v886, %v900
        %v903 = vmul.f32 %v887, %v901
        %v905 = vlaneseq
        %v906 = vshrl.u32 %v905, 7
        %v907 = vsub.s32 0, %v906
        %v908 = vrot.slane %v874, %v907
        %v910 = vmul.f32 %v902, %v908
        %v911 = vmul.f32 %v903, %v908
        %v913 = vlaneseq
        %v914 = vshrl.u32 %v913, 7
        %v915 = vsub.s32 0, %v914
        %v916 = vrot.slane %v875, %v915
        %v918 = vadd.f32 %v910, %v916
        %v919 = vadd.f32 %v911, %v916
        %v920 = vld [vmem:[%s729] sm:$0xf]
        %v921 = vld [vmem:[%s729 + $0x4] sm:$0xf]
        %v922 = vld [vmem:[%s729 + $0x8] sm:$0xf]
        %v923 = vld [vmem:[%s729 + $0xc] sm:$0xf]
        %v924 = vpack.c.bf16 %v919, %v918
        %v925 = vld [vmem:[%s732] sm:$0x1]
        %v927 = vlaneseq
        %v928 = vshrl.u32 %v927, 7
        %v929 = vsub.s32 0, %v928
        %v930 = vrot.slane %v925, %v929
        %v936 = vunpack.c.l.b16 %v920
        %v937 = vunpack.c.l.b16 %v921
        %v938 = vunpack.c.l.b16 %v922
        %v939 = vunpack.c.l.b16 %v923
        %v940 = vpack.c.b16 %v937, %v936
        %v941 = vpack.c.b16 %v939, %v938
        %v945 = vsel %vm876, %v924, 0
        %947 = vmatprep.subr.bf16.mxu0 0
        %948 = vmatpush1.bf16.msra.mxu0 0
        %949 = vmatprep.subr.bf16.mxu0 0
        %950 = vmatpush1.bf16.msra.mxu0 0
        %951 = vmatprep.subr.bf16.mxu0 0
        %952 = vmatpush1.bf16.msra.mxu0 0
        %953 = vmatprep.subr.bf16.mxu0 0
        %954 = vmatpush1.bf16.msra.mxu0 0
        %955 = vmatprep.subr.bf16.mxu0 0
        %956 = vmatpush1.bf16.msra.mxu0 0
        %957 = vmatprep.subr.bf16.mxu0 0
        %958 = vmatpush1.bf16.msra.mxu0 0
        %959 = vmatprep.subr.bf16.mxu0 0
        %960 = vmatpush1.bf16.msra.mxu0 %v941
        %961 = vmatprep.subr.bf16.mxu0 0
        %962 = vmatpush1.bf16.msra.mxu0 %v940
        %963 = vmatprep.subr.bf16.mxu0 0
        %964 = vmatpush2.bf16.msra.mxu0 0
        %965 = vmatprep.subr.bf16.mxu0 0
        %966 = vmatpush2.bf16.msra.mxu0 0
        %967 = vmatprep.subr.bf16.mxu0 0
        %968 = vmatpush2.bf16.msra.mxu0 0
        %969 = vmatprep.subr.bf16.mxu0 0
        %970 = vmatpush2.bf16.msra.mxu0 0
        %971 = vmatprep.subr.bf16.mxu0 0
        %972 = vmatpush2.bf16.msra.mxu0 0
        %973 = vmatprep.subr.bf16.mxu0 0
        %974 = vmatpush2.bf16.msra.mxu0 0
        %975 = vmatprep.subr.bf16.mxu0 0
        %976 = vmatpush2.bf16.msra.mxu0 0
        %977 = vmatprep.subr.bf16.mxu0 0
        %978 = vmatpush2.bf16.msra.mxu0 0
        %979 = vmatprep.mubr.bf16.mxu0 0
        %980 = vmatmul.mubr.bf16.gmra.mxu0 %v945
        %v981 = vpop.f32.mrf.mxu0
        %v982 = vadd.f32 %v930, %v981
        %v983 = vpop.f32.mrf.mxu0
        %v984 = vpop.f32.mrf.mxu0
        %v985 = vadd.f32 %v930, %v984
        %v986 = vpop.f32.mrf.mxu0
        %987 = vdwg.mxu0
        %v988 = vmul.f32 %v982, 0.25
        %v989 = vmul.f32 %v985, 0.25
        %v990 = vpack.c.bf16 %v988, %v988
        %v991 = vpack.c.bf16 %v989, %v989
        %v992 = vpack.c.bf16 %v982, %v982
        %v993 = vpack.c.bf16 %v985, %v985
        %995 = vrot.lane.b32.xlu0 %v992, 96
        %v996 = vpop.permute.xlu0 %995
        %vm997 = vcmask 130048
        %v999 = vsel %vm997, %v990, 0
        %v1002 = vsel %vm997, %v996, 0
        %1004 = vmatprep.subr.bf16.mxu0 0
        %1005 = vmatpush1.bf16.xpose.msra.mxu0 0
        %1006 = vmatprep.subr.bf16.mxu0 0
        %1007 = vmatpush1.bf16.xpose.msra.mxu0 0
        %1008 = vmatprep.subr.bf16.mxu0 0
        %1009 = vmatpush1.bf16.xpose.msra.mxu0 0
        %1010 = vmatprep.subr.bf16.mxu0 0
        %1011 = vmatpush1.bf16.xpose.msra.mxu0 0
        %1012 = vmatprep.subr.bf16.mxu0 0
        %1013 = vmatpush1.bf16.xpose.msra.mxu0 0
        %1014 = vmatprep.subr.bf16.mxu0 0
        %1015 = vmatpush1.bf16.xpose.msra.mxu0 0
        %1016 = vmatprep.subr.bf16.mxu0 0
        %1017 = vmatpush1.bf16.xpose.msra.mxu0 0
        %1018 = vmatprep.subr.bf16.mxu0 0
        %1019 = vmatpush1.bf16.xpose.msra.mxu0 %v1002
        %1020 = vmatprep.subr.bf16.mxu0 0
        %1021 = vmatpush2.bf16.xpose.msra.mxu0 0
        %1022 = vmatprep.subr.bf16.mxu0 0
        %1023 = vmatpush2.bf16.xpose.msra.mxu0 0
        %1024 = vmatprep.subr.bf16.mxu0 0
        %1025 = vmatpush2.bf16.xpose.msra.mxu0 0
        %1026 = vmatprep.subr.bf16.mxu0 0
        %1027 = vmatpush2.bf16.xpose.msra.mxu0 0
        %1028 = vmatprep.subr.bf16.mxu0 0
        %1029 = vmatpush2.bf16.xpose.msra.mxu0 0
        %1030 = vmatprep.subr.bf16.mxu0 0
        %1031 = vmatpush2.bf16.xpose.msra.mxu0 0
        %1032 = vmatprep.subr.bf16.mxu0 0
        %1033 = vmatpush2.bf16.xpose.msra.mxu0 0
        %1034 = vmatprep.subr.bf16.mxu0 0
        %1035 = vmatpush2.bf16.xpose.msra.mxu0 0
        %1036 = vmatprep.mubr.bf16.mxu0 0
        %1037 = vmatmul.mubr.bf16.gmra.mxu0 %v999
        %v1038 = vpop.f32.mrf.mxu0
        %v1039 = vadd.f32 %v870, %v1038
        %v1040 = vpop.f32.mrf.mxu0
        %v1041 = vpop.f32.mrf.mxu0
        %v1042 = vpop.f32.mrf.mxu0
        %1043 = vdwg.mxu0
        %1045 = vrot.lane.b32.xlu0 %v993, 96
        %v1046 = vpop.permute.xlu0 %1045
        %v1048 = vsel %vm997, %v991, 0
        %v1051 = vsel %vm997, %v1046, 0
        %1053 = vmatprep.subr.bf16.mxu0 0
        %1054 = vmatpush1.bf16.xpose.msra.mxu0 0
        %1055 = vmatprep.subr.bf16.mxu0 0
        %1056 = vmatpush1.bf16.xpose.msra.mxu0 0
        %1057 = vmatprep.subr.bf16.mxu0 0
        %1058 = vmatpush1.bf16.xpose.msra.mxu0 0
        %1059 = vmatprep.subr.bf16.mxu0 0
        %1060 = vmatpush1.bf16.xpose.msra.mxu0 0
        %1061 = vmatprep.subr.bf16.mxu0 0
        %1062 = vmatpush1.bf16.xpose.msra.mxu0 0
        %1063 = vmatprep.subr.bf16.mxu0 0
        %1064 = vmatpush1.bf16.xpose.msra.mxu0 0
        %1065 = vmatprep.subr.bf16.mxu0 0
        %1066 = vmatpush1.bf16.xpose.msra.mxu0 0
        %1067 = vmatprep.subr.bf16.mxu0 0
        %1068 = vmatpush1.bf16.xpose.msra.mxu0 %v1051
        %1069 = vmatprep.subr.bf16.mxu0 0
        %1070 = vmatpush2.bf16.xpose.msra.mxu0 0
        %1071 = vmatprep.subr.bf16.mxu0 0
        %1072 = vmatpush2.bf16.xpose.msra.mxu0 0
        %1073 = vmatprep.subr.bf16.mxu0 0
        %1074 = vmatpush2.bf16.xpose.msra.mxu0 0
        %1075 = vmatprep.subr.bf16.mxu0 0
        %1076 = vmatpush2.bf16.xpose.msra.mxu0 0
        %1077 = vmatprep.subr.bf16.mxu0 0
        %1078 = vmatpush2.bf16.xpose.msra.mxu0 0
        %1079 = vmatprep.subr.bf16.mxu0 0
        %1080 = vmatpush2.bf16.xpose.msra.mxu0 0
        %1081 = vmatprep.subr.bf16.mxu0 0
        %1082 = vmatpush2.bf16.xpose.msra.mxu0 0
        %1083 = vmatprep.subr.bf16.mxu0 0
        %1084 = vmatpush2.bf16.xpose.msra.mxu0 0
        %1085 = vmatprep.mubr.bf16.mxu0 0
        %1086 = vmatmul.mubr.bf16.gmra.mxu0 %v1048
        %v1087 = vpop.f32.mrf.mxu0
        %v1088 = vadd.f32 %v871, %v1087
        %v1089 = vpop.f32.mrf.mxu0
        %v1090 = vpop.f32.mrf.mxu0
        %v1091 = vpop.f32.mrf.mxu0
        %1092 = vdwg.mxu0
        %vm1093 = vcmask 64512
        %v1094 = vsel %vm1093, %v1039, -inf
        %1095 = vmax.xlane.f32.xlu0 %v1094
        %v1096 = vpop.xlane.xlu0 %1095
        %v1097 = vsel %vm1093, %v1088, -inf
        %1098 = vmax.xlane.f32.xlu0 %v1097
        %v1099 = vpop.xlane.xlu0 %1098
        %v1100 = vsub.f32 %v1039, %v1096
        %v1101 = vsub.f32 %v1088, %v1099
        %v1102 = vmul.f32 %v1100, 1.442695
        %v1103 = vpow.pop %v1102
        %v1104 = vmul.f32 %v1101, 1.442695
        %v1105 = vpow.pop %v1104
        %v1106 = vsel %vm1093, %v1103, 0.0
        %1107 = vadd.xlane.f32.xlu0 %v1106
        %v1108 = vpop.xlane.xlu0 %1107
        %v1109 = vsel %vm1093, %v1105, 0.0
        %1110 = vadd.xlane.f32.xlu0 %v1109
        %v1111 = vpop.xlane.xlu0 %1110
        %v1112 = vrcp.pop %v1108
        %v1113 = vrcp.pop %v1111
        %v1114 = vmul.f32 %v1103, %v1112
        %v1115 = vmul.f32 %v1105, %v1113
        %v1116 = vpack.c.bf16 %v1114, %v1114
        %v1117 = vpack.c.bf16 %v1115, %v1115
        %1118 = vrot.lane.b32.xlu0 %v992, 64
        %v1119 = vpop.permute.xlu0 %1118
        %v1121 = vsel %vm1093, %v1116, 0
        %vm1123 = vcmask 1043456
        %v1125 = vsel %vm1123, %v1119, 0
        %1127 = vmatprep.subr.bf16.mxu0 0
        %1128 = vmatpush1.bf16.msra.mxu0 0
        %1129 = vmatprep.subr.bf16.mxu0 0
        %1130 = vmatpush1.bf16.msra.mxu0 0
        %1131 = vmatprep.subr.bf16.mxu0 0
        %1132 = vmatpush1.bf16.msra.mxu0 0
        %1133 = vmatprep.subr.bf16.mxu0 0
        %1134 = vmatpush1.bf16.msra.mxu0 0
        %1135 = vmatprep.subr.bf16.mxu0 0
        %1136 = vmatpush1.bf16.msra.mxu0 0
        %1137 = vmatprep.subr.bf16.mxu0 0
        %1138 = vmatpush1.bf16.msra.mxu0 0
        %1139 = vmatprep.subr.bf16.mxu0 0
        %1140 = vmatpush1.bf16.msra.mxu0 0
        %1141 = vmatprep.subr.bf16.mxu0 0
        %1142 = vmatpush1.bf16.msra.mxu0 %v1125
        %1143 = vmatprep.subr.bf16.mxu0 0
        %1144 = vmatpush2.bf16.msra.mxu0 0
        %1145 = vmatprep.subr.bf16.mxu0 0
        %1146 = vmatpush2.bf16.msra.mxu0 0
        %1147 = vmatprep.subr.bf16.mxu0 0
        %1148 = vmatpush2.bf16.msra.mxu0 0
        %1149 = vmatprep.subr.bf16.mxu0 0
        %1150 = vmatpush2.bf16.msra.mxu0 0
        %1151 = vmatprep.subr.bf16.mxu0 0
        %1152 = vmatpush2.bf16.msra.mxu0 0
        %1153 = vmatprep.subr.bf16.mxu0 0
        %1154 = vmatpush2.bf16.msra.mxu0 0
        %1155 = vmatprep.subr.bf16.mxu0 0
        %1156 = vmatpush2.bf16.msra.mxu0 0
        %1157 = vmatprep.subr.bf16.mxu0 0
        %1158 = vmatpush2.bf16.msra.mxu0 0
        %1159 = vmatprep.mubr.bf16.mxu0 0
        %1160 = vmatmul.mubr.bf16.gmra.mxu0 %v1121
        %v1161 = vpop.f32.mrf.mxu0
        %v1162 = vadd.f32 0.0, %v1161
        %v1163 = vpop.f32.mrf.mxu0
        %v1164 = vpop.f32.mrf.mxu0
        %v1165 = vpop.f32.mrf.mxu0
        %1166 = vdwg.mxu0
        %1167 = vrot.lane.b32.xlu0 %v993, 64
        %v1168 = vpop.permute.xlu0 %1167
        %v1170 = vsel %vm1093, %v1117, 0
        %v1173 = vsel %vm1123, %v1168, 0
        %1175 = vmatprep.subr.bf16.mxu0 0
        %1176 = vmatpush1.bf16.msra.mxu0 0
        %1177 = vmatprep.subr.bf16.mxu0 0
        %1178 = vmatpush1.bf16.msra.mxu0 0
        %1179 = vmatprep.subr.bf16.mxu0 0
        %1180 = vmatpush1.bf16.msra.mxu0 0
        %1181 = vmatprep.subr.bf16.mxu0 0
        %1182 = vmatpush1.bf16.msra.mxu0 0
        %1183 = vmatprep.subr.bf16.mxu0 0
        %1184 = vmatpush1.bf16.msra.mxu0 0
        %1185 = vmatprep.subr.bf16.mxu0 0
        %1186 = vmatpush1.bf16.msra.mxu0 0
        %1187 = vmatprep.subr.bf16.mxu0 0
        %1188 = vmatpush1.bf16.msra.mxu0 0
        %1189 = vmatprep.subr.bf16.mxu0 0
        %1190 = vmatpush1.bf16.msra.mxu0 %v1173
        %1191 = vmatprep.subr.bf16.mxu0 0
        %1192 = vmatpush2.bf16.msra.mxu0 0
        %1193 = vmatprep.subr.bf16.mxu0 0
        %1194 = vmatpush2.bf16.msra.mxu0 0
        %1195 = vmatprep.subr.bf16.mxu0 0
        %1196 = vmatpush2.bf16.msra.mxu0 0
        %1197 = vmatprep.subr.bf16.mxu0 0
        %1198 = vmatpush2.bf16.msra.mxu0 0
        %1199 = vmatprep.subr.bf16.mxu0 0
        %1200 = vmatpush2.bf16.msra.mxu0 0
        %1201 = vmatprep.subr.bf16.mxu0 0
        %1202 = vmatpush2.bf16.msra.mxu0 0
        %1203 = vmatprep.subr.bf16.mxu0 0
        %1204 = vmatpush2.bf16.msra.mxu0 0
        %1205 = vmatprep.subr.bf16.mxu0 0
        %1206 = vmatpush2.bf16.msra.mxu0 0
        %1207 = vmatprep.mubr.bf16.mxu0 0
        %1208 = vmatmul.mubr.bf16.gmra.mxu0 %v1170
        %v1209 = vpop.f32.mrf.mxu0
        %v1210 = vadd.f32 0.0, %v1209
        %v1211 = vpop.f32.mrf.mxu0
        %v1212 = vpop.f32.mrf.mxu0
        %v1213 = vpop.f32.mrf.mxu0
        %1214 = vdwg.mxu0
        %1216 = vrot.lane.b32.xlu0 %v990, 112
        %v1217 = vpop.permute.xlu0 %1216
        %1218 = vrot.lane.b32.xlu0 %v992, 80
        %v1219 = vpop.permute.xlu0 %1218
        %v1221 = vsel %vm997, %v1217, 0
        %v1224 = vsel %vm997, %v1219, 0
        %1226 = vmatprep.subr.bf16.mxu0 0
        %1227 = vmatpush1.bf16.xpose.msra.mxu0 0
        %1228 = vmatprep.subr.bf16.mxu0 0
        %1229 = vmatpush1.bf16.xpose.msra.mxu0 0
        %1230 = vmatprep.subr.bf16.mxu0 0
        %1231 = vmatpush1.bf16.xpose.msra.mxu0 0
        %1232 = vmatprep.subr.bf16.mxu0 0
        %1233 = vmatpush1.bf16.xpose.msra.mxu0 0
        %1234 = vmatprep.subr.bf16.mxu0 0
        %1235 = vmatpush1.bf16.xpose.msra.mxu0 0
        %1236 = vmatprep.subr.bf16.mxu0 0
        %1237 = vmatpush1.bf16.xpose.msra.mxu0 0
        %1238 = vmatprep.subr.bf16.mxu0 0
        %1239 = vmatpush1.bf16.xpose.msra.mxu0 0
        %1240 = vmatprep.subr.bf16.mxu0 0
        %1241 = vmatpush1.bf16.xpose.msra.mxu0 %v1224
        %1242 = vmatprep.subr.bf16.mxu0 0
        %1243 = vmatpush2.bf16.xpose.msra.mxu0 0
        %1244 = vmatprep.subr.bf16.mxu0 0
        %1245 = vmatpush2.bf16.xpose.msra.mxu0 0
        %1246 = vmatprep.subr.bf16.mxu0 0
        %1247 = vmatpush2.bf16.xpose.msra.mxu0 0
        %1248 = vmatprep.subr.bf16.mxu0 0
        %1249 = vmatpush2.bf16.xpose.msra.mxu0 0
        %1250 = vmatprep.subr.bf16.mxu0 0
        %1251 = vmatpush2.bf16.xpose.msra.mxu0 0
        %1252 = vmatprep.subr.bf16.mxu0 0
        %1253 = vmatpush2.bf16.xpose.msra.mxu0 0
        %1254 = vmatprep.subr.bf16.mxu0 0
        %1255 = vmatpush2.bf16.xpose.msra.mxu0 0
        %1256 = vmatprep.subr.bf16.mxu0 0
        %1257 = vmatpush2.bf16.xpose.msra.mxu0 0
        %1258 = vmatprep.mubr.bf16.mxu0 0
        %1259 = vmatmul.mubr.bf16.gmra.mxu0 %v1221
        %v1260 = vpop.f32.mrf.mxu0
        %v1261 = vadd.f32 %v870, %v1260
        %v1262 = vpop.f32.mrf.mxu0
        %v1263 = vpop.f32.mrf.mxu0
        %v1264 = vpop.f32.mrf.mxu0
        %1265 = vdwg.mxu0
        %1267 = vrot.lane.b32.xlu0 %v991, 112
        %v1268 = vpop.permute.xlu0 %1267
        %1269 = vrot.lane.b32.xlu0 %v993, 80
        %v1270 = vpop.permute.xlu0 %1269
        %v1272 = vsel %vm997, %v1268, 0
        %v1275 = vsel %vm997, %v1270, 0
        %1277 = vmatprep.subr.bf16.mxu0 0
        %1278 = vmatpush1.bf16.xpose.msra.mxu0 0
        %1279 = vmatprep.subr.bf16.mxu0 0
        %1280 = vmatpush1.bf16.xpose.msra.mxu0 0
        %1281 = vmatprep.subr.bf16.mxu0 0
        %1282 = vmatpush1.bf16.xpose.msra.mxu0 0
        %1283 = vmatprep.subr.bf16.mxu0 0
        %1284 = vmatpush1.bf16.xpose.msra.mxu0 0
        %1285 = vmatprep.subr.bf16.mxu0 0
        %1286 = vmatpush1.bf16.xpose.msra.mxu0 0
        %1287 = vmatprep.subr.bf16.mxu0 0
        %1288 = vmatpush1.bf16.xpose.msra.mxu0 0
        %1289 = vmatprep.subr.bf16.mxu0 0
        %1290 = vmatpush1.bf16.xpose.msra.mxu0 0
        %1291 = vmatprep.subr.bf16.mxu0 0
        %1292 = vmatpush1.bf16.xpose.msra.mxu0 %v1275
        %1293 = vmatprep.subr.bf16.mxu0 0
        %1294 = vmatpush2.bf16.xpose.msra.mxu0 0
        %1295 = vmatprep.subr.bf16.mxu0 0
        %1296 = vmatpush2.bf16.xpose.msra.mxu0 0
        %1297 = vmatprep.subr.bf16.mxu0 0
        %1298 = vmatpush2.bf16.xpose.msra.mxu0 0
        %1299 = vmatprep.subr.bf16.mxu0 0
        %1300 = vmatpush2.bf16.xpose.msra.mxu0 0
        %1301 = vmatprep.subr.bf16.mxu0 0
        %1302 = vmatpush2.bf16.xpose.msra.mxu0 0
        %1303 = vmatprep.subr.bf16.mxu0 0
        %1304 = vmatpush2.bf16.xpose.msra.mxu0 0
        %1305 = vmatprep.subr.bf16.mxu0 0
        %1306 = vmatpush2.bf16.xpose.msra.mxu0 0
        %1307 = vmatprep.subr.bf16.mxu0 0
        %1308 = vmatpush2.bf16.xpose.msra.mxu0 0
        %1309 = vmatprep.mubr.bf16.mxu0 0
        %1310 = vmatmul.mubr.bf16.gmra.mxu0 %v1272
        %v1311 = vpop.f32.mrf.mxu0
        %v1312 = vadd.f32 %v871, %v1311
        %v1313 = vpop.f32.mrf.mxu0
        %v1314 = vpop.f32.mrf.mxu0
        %v1315 = vpop.f32.mrf.mxu0
        %1316 = vdwg.mxu0
        %v1317 = vsel %vm1093, %v1261, -inf
        %1318 = vmax.xlane.f32.xlu0 %v1317
        %v1319 = vpop.xlane.xlu0 %1318
        %v1320 = vsel %vm1093, %v1312, -inf
        %1321 = vmax.xlane.f32.xlu0 %v1320
        %v1322 = vpop.xlane.xlu0 %1321
        %v1323 = vsub.f32 %v1261, %v1319
        %v1324 = vsub.f32 %v1312, %v1322
        %v1325 = vmul.f32 %v1323, 1.442695
        %v1326 = vpow.pop %v1325
        %v1327 = vmul.f32 %v1324, 1.442695
        %v1328 = vpow.pop %v1327
        %v1329 = vsel %vm1093, %v1326, 0.0
        %1330 = vadd.xlane.f32.xlu0 %v1329
        %v1331 = vpop.xlane.xlu0 %1330
        %v1332 = vsel %vm1093, %v1328, 0.0
        %1333 = vadd.xlane.f32.xlu0 %v1332
        %v1334 = vpop.xlane.xlu0 %1333
        %v1335 = vrcp.pop %v1331
        %v1336 = vrcp.pop %v1334
        %v1337 = vmul.f32 %v1326, %v1335
        %v1338 = vmul.f32 %v1328, %v1336
        %v1339 = vpack.c.bf16 %v1337, %v1337
        %v1340 = vpack.c.bf16 %v1338, %v1338
        %1341 = vrot.lane.b32.xlu0 %v992, 48
        %v1342 = vpop.permute.xlu0 %1341
        %v1344 = vsel %vm1093, %v1339, 0
        %v1347 = vsel %vm1123, %v1342, 0
        %1349 = vmatprep.subr.bf16.mxu0 0
        %1350 = vmatpush1.bf16.msra.mxu0 0
        %1351 = vmatprep.subr.bf16.mxu0 0
        %1352 = vmatpush1.bf16.msra.mxu0 0
        %1353 = vmatprep.subr.bf16.mxu0 0
        %1354 = vmatpush1.bf16.msra.mxu0 0
        %1355 = vmatprep.subr.bf16.mxu0 0
        %1356 = vmatpush1.bf16.msra.mxu0 0
        %1357 = vmatprep.subr.bf16.mxu0 0
        %1358 = vmatpush1.bf16.msra.mxu0 0
        %1359 = vmatprep.subr.bf16.mxu0 0
        %1360 = vmatpush1.bf16.msra.mxu0 0
        %1361 = vmatprep.subr.bf16.mxu0 0
        %1362 = vmatpush1.bf16.msra.mxu0 0
        %1363 = vmatprep.subr.bf16.mxu0 0
        %1364 = vmatpush1.bf16.msra.mxu0 %v1347
        %1365 = vmatprep.subr.bf16.mxu0 0
        %1366 = vmatpush2.bf16.msra.mxu0 0
        %1367 = vmatprep.subr.bf16.mxu0 0
        %1368 = vmatpush2.bf16.msra.mxu0 0
        %1369 = vmatprep.subr.bf16.mxu0 0
        %1370 = vmatpush2.bf16.msra.mxu0 0
        %1371 = vmatprep.subr.bf16.mxu0 0
        %1372 = vmatpush2.bf16.msra.mxu0 0
        %1373 = vmatprep.subr.bf16.mxu0 0
        %1374 = vmatpush2.bf16.msra.mxu0 0
        %1375 = vmatprep.subr.bf16.mxu0 0
        %1376 = vmatpush2.bf16.msra.mxu0 0
        %1377 = vmatprep.subr.bf16.mxu0 0
        %1378 = vmatpush2.bf16.msra.mxu0 0
        %1379 = vmatprep.subr.bf16.mxu0 0
        %1380 = vmatpush2.bf16.msra.mxu0 0
        %1381 = vmatprep.mubr.bf16.mxu0 0
        %1382 = vmatmul.mubr.bf16.gmra.mxu0 %v1344
        %v1383 = vpop.f32.mrf.mxu0
        %v1384 = vadd.f32 0.0, %v1383
        %v1385 = vpop.f32.mrf.mxu0
        %v1386 = vpop.f32.mrf.mxu0
        %v1387 = vpop.f32.mrf.mxu0
        %1388 = vdwg.mxu0
        %1389 = vrot.lane.b32.xlu0 %v993, 48
        %v1390 = vpop.permute.xlu0 %1389
        %v1392 = vsel %vm1093, %v1340, 0
        %v1395 = vsel %vm1123, %v1390, 0
        %1397 = vmatprep.subr.bf16.mxu0 0
        %1398 = vmatpush1.bf16.msra.mxu0 0
        %1399 = vmatprep.subr.bf16.mxu0 0
        %1400 = vmatpush1.bf16.msra.mxu0 0
        %1401 = vmatprep.subr.bf16.mxu0 0
        %1402 = vmatpush1.bf16.msra.mxu0 0
        %1403 = vmatprep.subr.bf16.mxu0 0
        %1404 = vmatpush1.bf16.msra.mxu0 0
        %1405 = vmatprep.subr.bf16.mxu0 0
        %1406 = vmatpush1.bf16.msra.mxu0 0
        %1407 = vmatprep.subr.bf16.mxu0 0
        %1408 = vmatpush1.bf16.msra.mxu0 0
        %1409 = vmatprep.subr.bf16.mxu0 0
        %1410 = vmatpush1.bf16.msra.mxu0 0
        %1411 = vmatprep.subr.bf16.mxu0 0
        %1412 = vmatpush1.bf16.msra.mxu0 %v1395
        %1413 = vmatprep.subr.bf16.mxu0 0
        %1414 = vmatpush2.bf16.msra.mxu0 0
        %1415 = vmatprep.subr.bf16.mxu0 0
        %1416 = vmatpush2.bf16.msra.mxu0 0
        %1417 = vmatprep.subr.bf16.mxu0 0
        %1418 = vmatpush2.bf16.msra.mxu0 0
        %1419 = vmatprep.subr.bf16.mxu0 0
        %1420 = vmatpush2.bf16.msra.mxu0 0
        %1421 = vmatprep.subr.bf16.mxu0 0
        %1422 = vmatpush2.bf16.msra.mxu0 0
        %1423 = vmatprep.subr.bf16.mxu0 0
        %1424 = vmatpush2.bf16.msra.mxu0 0
        %1425 = vmatprep.subr.bf16.mxu0 0
        %1426 = vmatpush2.bf16.msra.mxu0 0
        %1427 = vmatprep.subr.bf16.mxu0 0
        %1428 = vmatpush2.bf16.msra.mxu0 0
        %1429 = vmatprep.mubr.bf16.mxu0 0
        %1430 = vmatmul.mubr.bf16.gmra.mxu0 %v1392
        %v1431 = vpop.f32.mrf.mxu0
        %v1432 = vadd.f32 0.0, %v1431
        %v1433 = vpop.f32.mrf.mxu0
        %v1434 = vpop.f32.mrf.mxu0
        %v1435 = vpop.f32.mrf.mxu0
        %1436 = vdwg.mxu0
        %1439 = vrot.lane.b32.xlu0 %v1384, 16
        %v1440 = vpop.permute.xlu0 %1439
        %1441 = vrot.lane.b32.xlu0 %v1432, 16
        %v1442 = vpop.permute.xlu0 %1441
        %v1445 = vsel %vm997, %v1162, %v1440
        %v1446 = vsel %vm997, %v1210, %v1442
        %v1447 = vld [vmem:[%s737] sm:$0xf]
        %v1448 = vld [vmem:[%s737 + $0x4] sm:$0xf]
        %v1449 = vld [vmem:[%s737 + $0x8] sm:$0xf]
        %v1450 = vld [vmem:[%s737 + $0xc] sm:$0xf]
        %v1451 = vpack.c.bf16 %v1446, %v1445
        %v1452 = vld [vmem:[%s740] sm:$0x1]
        %v1454 = vlaneseq
        %v1455 = vshrl.u32 %v1454, 7
        %v1456 = vsub.s32 0, %v1455
        %v1457 = vrot.slane %v1452, %v1456
        %v1463 = vunpack.c.l.b16 %v1447
        %v1464 = vunpack.c.l.b16 %v1448
        %v1465 = vunpack.c.l.b16 %v1449
        %v1466 = vunpack.c.l.b16 %v1450
        %v1467 = vpack.c.b16 %v1464, %v1463
        %v1468 = vpack.c.b16 %v1466, %v1465
        %v1472 = vsel %vm876, %v1451, 0
        %1474 = vmatprep.subr.bf16.mxu0 0
        %1475 = vmatpush1.bf16.msra.mxu0 0
        %1476 = vmatprep.subr.bf16.mxu0 0
        %1477 = vmatpush1.bf16.msra.mxu0 0
        %1478 = vmatprep.subr.bf16.mxu0 0
        %1479 = vmatpush1.bf16.msra.mxu0 0
        %1480 = vmatprep.subr.bf16.mxu0 0
        %1481 = vmatpush1.bf16.msra.mxu0 0
        %1482 = vmatprep.subr.bf16.mxu0 0
        %1483 = vmatpush1.bf16.msra.mxu0 0
        %1484 = vmatprep.subr.bf16.mxu0 0
        %1485 = vmatpush1.bf16.msra.mxu0 0
        %1486 = vmatprep.subr.bf16.mxu0 0
        %1487 = vmatpush1.bf16.msra.mxu0 %v1468
        %1488 = vmatprep.subr.bf16.mxu0 0
        %1489 = vmatpush1.bf16.msra.mxu0 %v1467
        %1490 = vmatprep.subr.bf16.mxu0 0
        %1491 = vmatpush2.bf16.msra.mxu0 0
        %1492 = vmatprep.subr.bf16.mxu0 0
        %1493 = vmatpush2.bf16.msra.mxu0 0
        %1494 = vmatprep.subr.bf16.mxu0 0
        %1495 = vmatpush2.bf16.msra.mxu0 0
        %1496 = vmatprep.subr.bf16.mxu0 0
        %1497 = vmatpush2.bf16.msra.mxu0 0
        %1498 = vmatprep.subr.bf16.mxu0 0
        %1499 = vmatpush2.bf16.msra.mxu0 0
        %1500 = vmatprep.subr.bf16.mxu0 0
        %1501 = vmatpush2.bf16.msra.mxu0 0
        %1502 = vmatprep.subr.bf16.mxu0 0
        %1503 = vmatpush2.bf16.msra.mxu0 0
        %1504 = vmatprep.subr.bf16.mxu0 0
        %1505 = vmatpush2.bf16.msra.mxu0 0
        %1506 = vmatprep.mubr.bf16.mxu0 0
        %1507 = vmatmul.mubr.bf16.gmra.mxu0 %v1472
        %v1508 = vpop.f32.mrf.mxu0
        %v1509 = vadd.f32 %v1457, %v1508
        %v1510 = vpop.f32.mrf.mxu0
        %v1511 = vpop.f32.mrf.mxu0
        %v1512 = vadd.f32 %v1457, %v1511
        %v1513 = vpop.f32.mrf.mxu0
        %1514 = vdwg.mxu0
        %v1515 = vadd.f32 %v872, %v1509
        %v1516 = vadd.f32 %v873, %v1512
        %v1517 = vld [vmem:[%s743] sm:$0x1]
        %v1518 = vld [vmem:[%s746] sm:$0x1]
        %v1519 = vsel %vm876, %v1515, 0.0
        %1520 = vadd.xlane.f32.xlu0 %v1519
        %v1521 = vpop.xlane.xlu0 %1520
        %v1522 = vsel %vm876, %v1516, 0.0
        %1523 = vadd.xlane.f32.xlu0 %v1522
        %v1524 = vpop.xlane.xlu0 %1523
        %v1525 = vmul.f32 %v1521, %v883
        %v1526 = vmul.f32 %v1524, %v883
        %v1527 = vsub.f32 %v1515, %v1525
        %v1528 = vsub.f32 %v1516, %v1526
        %v1529 = vmul.f32 %v1527, %v1527
        %v1530 = vmul.f32 %v1528, %v1528
        %v1531 = vsel %vm876, %v1529, 0.0
        %1532 = vadd.xlane.f32.xlu0 %v1531
        %v1533 = vpop.xlane.xlu0 %1532
        %v1534 = vsel %vm876, %v1530, 0.0
        %1535 = vadd.xlane.f32.xlu0 %v1534
        %v1536 = vpop.xlane.xlu0 %1535
        %v1537 = vmul.f32 %v1533, %v883
        %v1538 = vmul.f32 %v1536, %v883
        %v1539 = vadd.f32 %v1537, 1e-05
        %v1540 = vadd.f32 %v1538, 1e-05
        %v1541 = vrsqrt.pop %v1539
        %v1542 = vrsqrt.pop %v1540
        %v1543 = vmul.f32 %v1527, %v1541
        %v1544 = vmul.f32 %v1528, %v1542
        %v1546 = vlaneseq
        %v1547 = vshrl.u32 %v1546, 7
        %v1548 = vsub.s32 0, %v1547
        %v1549 = vrot.slane %v1517, %v1548
        %v1551 = vmul.f32 %v1543, %v1549
        %v1552 = vmul.f32 %v1544, %v1549
        %v1554 = vlaneseq
        %v1555 = vshrl.u32 %v1554, 7
        %v1556 = vsub.s32 0, %v1555
        %v1557 = vrot.slane %v1518, %v1556
        %v1559 = vadd.f32 %v1551, %v1557
        %v1560 = vadd.f32 %v1552, %v1557
        %v1561 = vld [vmem:[%s751] sm:$0xf]
        %v1562 = vld [vmem:[%s751 + $0x4] sm:$0xf]
        %v1563 = vld [vmem:[%s751 + $0x8] sm:$0xf]
        %v1564 = vld [vmem:[%s751 + $0xc] sm:$0xf]
        %v1565 = vpack.c.bf16 %v1560, %v1559
        %v1566 = vld [vmem:[%s754] sm:$0x1]
        %v1568 = vlaneseq
        %v1569 = vshrl.u32 %v1568, 7
        %v1570 = vsub.s32 0, %v1569
        %v1571 = vrot.slane %v1566, %v1570
        %v1577 = vunpack.c.l.b16 %v1561
        %v1578 = vunpack.c.l.b16 %v1562
        %v1579 = vunpack.c.l.b16 %v1563
        %v1580 = vunpack.c.l.b16 %v1564
        %v1581 = vpack.c.b16 %v1578, %v1577
        %v1582 = vpack.c.b16 %v1580, %v1579
        %v1586 = vsel %vm876, %v1565, 0
        %1588 = vmatprep.subr.bf16.mxu0 0
        %1589 = vmatpush1.bf16.msra.mxu0 0
        %1590 = vmatprep.subr.bf16.mxu0 0
        %1591 = vmatpush1.bf16.msra.mxu0 0
        %1592 = vmatprep.subr.bf16.mxu0 0
        %1593 = vmatpush1.bf16.msra.mxu0 0
        %1594 = vmatprep.subr.bf16.mxu0 0
        %1595 = vmatpush1.bf16.msra.mxu0 0
        %1596 = vmatprep.subr.bf16.mxu0 0
        %1597 = vmatpush1.bf16.msra.mxu0 0
        %1598 = vmatprep.subr.bf16.mxu0 0
        %1599 = vmatpush1.bf16.msra.mxu0 0
        %1600 = vmatprep.subr.bf16.mxu0 0
        %1601 = vmatpush1.bf16.msra.mxu0 %v1582
        %1602 = vmatprep.subr.bf16.mxu0 0
        %1603 = vmatpush1.bf16.msra.mxu0 %v1581
        %1604 = vmatprep.subr.bf16.mxu0 0
        %1605 = vmatpush2.bf16.msra.mxu0 0
        %1606 = vmatprep.subr.bf16.mxu0 0
        %1607 = vmatpush2.bf16.msra.mxu0 0
        %1608 = vmatprep.subr.bf16.mxu0 0
        %1609 = vmatpush2.bf16.msra.mxu0 0
        %1610 = vmatprep.subr.bf16.mxu0 0
        %1611 = vmatpush2.bf16.msra.mxu0 0
        %1612 = vmatprep.subr.bf16.mxu0 0
        %1613 = vmatpush2.bf16.msra.mxu0 0
        %1614 = vmatprep.subr.bf16.mxu0 0
        %1615 = vmatpush2.bf16.msra.mxu0 0
        %1616 = vmatprep.subr.bf16.mxu0 0
        %1617 = vmatpush2.bf16.msra.mxu0 0
        %1618 = vmatprep.subr.bf16.mxu0 0
        %1619 = vmatpush2.bf16.msra.mxu0 0
        %1620 = vmatprep.mubr.bf16.mxu0 0
        %1621 = vmatmul.mubr.bf16.gmra.mxu0 %v1586
        %v1622 = vpop.f32.mrf.mxu0
        %v1623 = vadd.f32 %v1571, %v1622
        %v1624 = vpop.f32.mrf.mxu0
        %v1625 = vpop.f32.mrf.mxu0
        %v1626 = vadd.f32 %v1571, %v1625
        %v1627 = vpop.f32.mrf.mxu0
        %1628 = vdwg.mxu0
        %v1629 = vmul.f32 %v1623, 0.5
        %v1630 = vmul.f32 %v1626, 0.5
        %v1631 = vmul.f32 %v1623, 0.044715
        %v1632 = vmul.f32 %v1626, 0.044715
        %v1633 = vmul.f32 %v1631, %v1623
        %v1634 = vmul.f32 %v1632, %v1626
        %v1635 = vmul.f32 %v1633, %v1623
        %v1636 = vmul.f32 %v1634, %v1626
        %v1637 = vadd.f32 %v1623, %v1635
        %v1638 = vadd.f32 %v1626, %v1636
        %v1639 = vmul.f32 %v1637, 0.7978846
        %v1640 = vmul.f32 %v1638, 0.7978846
        %v1641 = vtanh.pop %v1639
        %v1642 = vtanh.pop %v1640
        %v1643 = vadd.f32 %v1641, 1.0
        %v1644 = vadd.f32 %v1642, 1.0
        %v1645 = vmul.f32 %v1629, %v1643
        %v1646 = vmul.f32 %v1630, %v1644
        %v1647 = vld [vmem:[%s759] sm:$0xf]
        %v1648 = vld [vmem:[%s759 + $0x4] sm:$0xf]
        %v1649 = vld [vmem:[%s759 + $0x8] sm:$0xf]
        %v1650 = vld [vmem:[%s759 + $0xc] sm:$0xf]
        %v1651 = vld [vmem:[%s759 + $0x10] sm:$0xf]
        %v1652 = vld [vmem:[%s759 + $0x14] sm:$0xf]
        %v1653 = vld [vmem:[%s759 + $0x18] sm:$0xf]
        %v1654 = vld [vmem:[%s759 + $0x1c] sm:$0xf]
        %v1655 = vld [vmem:[%s759 + $0x20] sm:$0xf]
        %v1656 = vld [vmem:[%s759 + $0x24] sm:$0xf]
        %v1657 = vld [vmem:[%s759 + $0x28] sm:$0xf]
        %v1658 = vld [vmem:[%s759 + $0x2c] sm:$0xf]
        %v1659 = vld [vmem:[%s759 + $0x30] sm:$0xf]
        %v1660 = vld [vmem:[%s759 + $0x34] sm:$0xf]
        %v1661 = vld [vmem:[%s759 + $0x38] sm:$0xf]
        %v1662 = vld [vmem:[%s759 + $0x3c] sm:$0xf]
        %v1663 = vpack.c.bf16 %v1646, %v1645
        %v1664 = vld [vmem:[%s762] sm:$0x1]
        %v1666 = vlaneseq
        %v1667 = vshrl.u32 %v1666, 7
        %v1668 = vsub.s32 0, %v1667
        %v1669 = vrot.slane %v1664, %v1668
        %v1687 = vunpack.c.l.b16 %v1647
        %v1688 = vunpack.c.l.b16 %v1648
        %v1689 = vunpack.c.l.b16 %v1649
        %v1690 = vunpack.c.l.b16 %v1650
        %v1691 = vunpack.c.l.b16 %v1651
        %v1692 = vunpack.c.l.b16 %v1652
        %v1693 = vunpack.c.l.b16 %v1653
        %v1694 = vunpack.c.l.b16 %v1654
        %v1695 = vunpack.c.l.b16 %v1655
        %v1696 = vunpack.c.l.b16 %v1656
        %v1697 = vunpack.c.l.b16 %v1657
        %v1698 = vunpack.c.l.b16 %v1658
        %v1699 = vunpack.c.l.b16 %v1659
        %v1700 = vunpack.c.l.b16 %v1660
        %v1701 = vunpack.c.l.b16 %v1661
        %v1702 = vunpack.c.l.b16 %v1662
        %v1703 = vpack.c.b16 %v1688, %v1687
        %v1704 = vpack.c.b16 %v1690, %v1689
        %v1705 = vpack.c.b16 %v1692, %v1691
        %v1706 = vpack.c.b16 %v1694, %v1693
        %v1707 = vpack.c.b16 %v1696, %v1695
        %v1708 = vpack.c.b16 %v1698, %v1697
        %v1709 = vpack.c.b16 %v1700, %v1699
        %v1710 = vpack.c.b16 %v1702, %v1701
        %1719 = vmatprep.subr.bf16.mxu0 0
        %1720 = vmatpush1.bf16.msra.mxu0 %v1710
        %1721 = vmatprep.subr.bf16.mxu0 0
        %1722 = vmatpush1.bf16.msra.mxu0 %v1709
        %1723 = vmatprep.subr.bf16.mxu0 0
        %1724 = vmatpush1.bf16.msra.mxu0 %v1708
        %1725 = vmatprep.subr.bf16.mxu0 0
        %1726 = vmatpush1.bf16.msra.mxu0 %v1707
        %1727 = vmatprep.subr.bf16.mxu0 0
        %1728 = vmatpush1.bf16.msra.mxu0 %v1706
        %1729 = vmatprep.subr.bf16.mxu0 0
        %1730 = vmatpush1.bf16.msra.mxu0 %v1705
        %1731 = vmatprep.subr.bf16.mxu0 0
        %1732 = vmatpush1.bf16.msra.mxu0 %v1704
        %1733 = vmatprep.subr.bf16.mxu0 0
        %1734 = vmatpush1.bf16.msra.mxu0 %v1703
        %1735 = vmatprep.subr.bf16.mxu0 0
        %1736 = vmatpush2.bf16.msra.mxu0 0
        %1737 = vmatprep.subr.bf16.mxu0 0
        %1738 = vmatpush2.bf16.msra.mxu0 0
        %1739 = vmatprep.subr.bf16.mxu0 0
        %1740 = vmatpush2.bf16.msra.mxu0 0
        %1741 = vmatprep.subr.bf16.mxu0 0
        %1742 = vmatpush2.bf16.msra.mxu0 0
        %1743 = vmatprep.subr.bf16.mxu0 0
        %1744 = vmatpush2.bf16.msra.mxu0 0
        %1745 = vmatprep.subr.bf16.mxu0 0
        %1746 = vmatpush2.bf16.msra.mxu0 0
        %1747 = vmatprep.subr.bf16.mxu0 0
        %1748 = vmatpush2.bf16.msra.mxu0 0
        %1749 = vmatprep.subr.bf16.mxu0 0
        %1750 = vmatpush2.bf16.msra.mxu0 0
        %1751 = vmatprep.mubr.bf16.mxu0 0
        %1752 = vmatmul.mubr.bf16.gmra.mxu0 %v1663
        %v1753 = vpop.f32.mrf.mxu0
        %v1754 = vadd.f32 %v1669, %v1753
        %v1755 = vpop.f32.mrf.mxu0
        %v1756 = vpop.f32.mrf.mxu0
        %v1757 = vadd.f32 %v1669, %v1756
        %v1758 = vpop.f32.mrf.mxu0
        %1759 = vdwg.mxu0
        %v1760 = vadd.f32 %v1515, %v1754
        %v1761 = vadd.f32 %v1516, %v1757
        %1762 = vst.msk [vmem:[#allocation2] sm:$0xff] %vm876, %v1760
        %1763 = vst.msk [vmem:[#allocation2 + $0x8] sm:$0xff] %vm876, %v1761
        %p1764 = scmp.eq.s32.totalorder %s34, 1
        // Predicated region
        $region93: #{tpu_custom_call.1} parent=87 // pred_check
          %p1765 = pneg %p1764
        $region94: #{tpu_custom_call.1} parent=87 // pred_check_branch
          %1767 = sbr.rel (%p1765) target = $region96
        $region95: #{tpu_custom_call.1} parent=87 // pred_region
          %1768 = vst.msk [vmem:[#allocation3] sm:$0xff] %vm876, %v1760
          %1769 = vst.msk [vmem:[#allocation3 + $0x8] sm:$0xff] %vm876, %v1761
        $region96: #{tpu_custom_call.1} parent=87 // pred_fallthru
          _
        // Predicated region
        $region97: #{tpu_custom_call.1} parent=87 // pred_check
          %p1770 = pneg %p486
        $region98: #{tpu_custom_call.1} parent=87 // pred_check_branch
          %1772 = sbr.rel (%p1770) target = $region100
        $region99: #{tpu_custom_call.1} parent=87 // pred_region
          %s1773 = smul.u32 2, %s33
          %s1775 = ssub.s32 256, 256
          %1776 = vsyncadd [#allocation4], %s1775
          %s1777 = smul.addr %s1773, 128
          %s1778 = scalar_lea.hbm %s17, %s1777
          %s1779 = sshll.u32 [#allocation3], 4
          %s1780 = int_to_ptr.vmem [resolvable:$true] %s1779
          %1785 = dma.vmem_to_hbm [thread:$0]  %s1780, 256, %s1778, [#allocation4], 128, 128, 8
        $region100: #{tpu_custom_call.1} parent=87 // pred_fallthru
          _
        // Predicated region
        $region101: #{tpu_custom_call.1} parent=87 // pred_check
          %p1786 = pneg %p486
        $region102: #{tpu_custom_call.1} parent=87 // pred_check_branch
          %1788 = sbr.rel (%p1786) target = $region104
        $region103: #{tpu_custom_call.1} parent=87 // pred_region
          %1789 = dma.done [#allocation4], 256
        $region104: #{tpu_custom_call.1} parent=87 // pred_fallthru
          _
      $region88: #{tpu_custom_call.1} parent=5 // pred_fallthru
        _
      %p1790 = scmp.le.s32.totalorder 2, %s24
      // Predicated region
      $region105: #{tpu_custom_call.1} parent=5 // pred_check
        %p1791 = pneg %p1790
      $region106: #{tpu_custom_call.1} parent=5 // pred_check_branch
        %1793 = sbr.rel (%p1791) target = $region108
      $region107: #{tpu_custom_call.1} parent=5 // pred_region
        %s1794 = ssub.s32 %s24, 2
      $region108: #{tpu_custom_call.1} parent=5 // pred_fallthru
        _
    $region6: #{tpu_custom_call.1} parent=1 // loop_footer
      %s28 = sadd.s32 1, %s24
    $region7: #{tpu_custom_call.1} parent=1 // loop_footer_branch
      %23 = sbr.rel target = $region3
    $region8: #{tpu_custom_call.1} parent=1 // loop_exit
      _
    %1795 = vsyncpa [#allocation4], 1
    %s1796 = scalar_lea.sflag [#allocation4], 1
    %1797 = vsyncpa %s1796, 1

</llo_original>
